<compile_context>
chip_gen: v5e
topology: v5e:2x2
jax: 0.10.0
libtpu: 0.0.40
codegen_flags: <defaults>
</compile_context>

<pallas_src>
import functools

import jax
import jax.numpy as jnp
from jax.experimental import pallas as pl
from jax.experimental.pallas import tpu as pltpu

_HIGHEST = jax.lax.Precision.HIGHEST  # reference only


# --------------------------------------------------------------------------
# Kernels (internal layout: (channels, flattened spatial) -> lane-dense)
# --------------------------------------------------------------------------
def _unit_s1_kernel(x_ref, w1_ref, b1_ref, wd_ref, bd_ref, w2_ref, b2_ref,
                    o_ref, pad_ref, *, H, W):
    """stride-1 unit: passthrough half + fused branch2, shuffled output.

    x_ref  : (1, 2, Cb, L) f32   [0]=x1 (passthrough), [1]=x2 (branch2), L=H*W
    w1/w2  : (Cb, Cb) bf16       folded-BN 1x1 conv weights
    wd     : (Cb, 25) f32        folded-BN depthwise 5x5 taps
    o_ref  : (1, Cb, 2*L) f32    o[:, j, :L]=x1[j], o[:, j, L:]=branch2(x2)[j]
                                 -> free reshape gives cat + channel_shuffle(2)
    pad_ref: (Cb, L + 2*M) f32   VMEM scratch with zero halo, M = 2*W + 2
    """
    L = H * W
    M = 2 * W + 2
    cb = o_ref.shape[1]

    # passthrough half -> even output channels (first half of each lane row)
    o_ref[0, :, :L] = x_ref[0, 0]

    # 1x1 conv (+folded BN) + ReLU : single-pass bf16 MXU matmul, f32 acc.
    y = jnp.dot(w1_ref[...], x_ref[0, 1].astype(jnp.bfloat16),
                preferred_element_type=jnp.float32)
    y = jnp.maximum(y + b1_ref[...], 0.0)

    # 5x5 depthwise conv, stride 1, pad 2 (+folded BN).
    # Halo re-zeroed each step (megacore-safe); interior fully rewritten.
    pad_ref[:, :M] = jnp.zeros((cb, M), jnp.float32)
    pad_ref[:, M + L:] = jnp.zeros((cb, M), jnp.float32)
    pad_ref[:, M:M + L] = y

    col = jax.lax.broadcasted_iota(jnp.int32, (1, L), 1) % W
    wd = wd_ref[...]                                      # (Cb, 25)

    # Taps grouped by dx: 5 independent 5-tap MAC chains, one wrap-around
    # mask per group (valid: at a masked column every tap of that group reads
    # a horizontally out-of-range pixel whose correct contribution is zero).
    parts = {}
    for k in range(25):
        dy, dx = k // 5 - 2, k % 5 - 2
        start = M + dy * W + dx                           # static offset
        term = wd[:, k:k + 1] * pad_ref[:, start:start + L]
        parts[dx] = term if dx not in parts else parts[dx] + term
    gm2 = jnp.where(col >= 2, parts[-2], 0.0)
    gm1 = jnp.where(col >= 1, parts[-1], 0.0)
    gp1 = jnp.where(col < W - 1, parts[1], 0.0)
    gp2 = jnp.where(col < W - 2, parts[2], 0.0)
    z = ((gm2 + gm1) + parts[0]) + (gp1 + gp2) + bd_ref[...]

    # 1x1 conv (+folded BN) + ReLU -> odd output channels
    o2 = jnp.dot(w2_ref[...], z.astype(jnp.bfloat16),
                 preferred_element_type=jnp.float32)
    o_ref[0, :, L:] = jnp.maximum(o2 + b2_ref[...], 0.0).astype(o_ref.dtype)


def _unit_s2_kernel(xp_ref,
                    wd1_ref, bd1_ref, w11_ref, b11_ref,
                    w21_ref, b21_ref, wd2_ref, bd2_ref, w22_ref, b22_ref,
                    o_ref, pad1_ref, pad2_ref, *, Ho, Wo):
    """stride-2 unit: branch1 + branch2 fused, computed at output resolution.

    xp_ref : (1, Cin, 4*L) f32  polyphase planes concatenated along lanes,
                                phase ph = 2*(h%2)+(w%2) at [ph*L:(ph+1)*L]
    o_ref  : (1, Cb, 2*L)       o[:, j, :L]=branch1[j], o[:, j, L:]=branch2[j]
    pad1   : (4, Cin, L+2M)     zero-halo scratch for branch1, M = Wo+1
    pad2   : (4, Cb , L+2M)     zero-halo scratch for branch2
    """
    L = Ho * Wo
    M = Wo + 1
    cin = xp_ref.shape[1]
    cb = o_ref.shape[1]

    col = jax.lax.broadcasted_iota(jnp.int32, (1, L), 1) % Wo

    def dw5x5_stride2(pad_ref, wd):
        # out[., i, j] = sum_{dy,dx} wd[., tap] * in[., 2i+dy, 2j+dx]
        # 2i+dy = 2*(i+p)+a  ->  tap reads phase (a,b), shifted by (p, q).
        # Taps grouped by (q, dy-parity): 6 independent chains, one mask per q.
        parts = {}
        for k in range(25):
            dy, dx = k // 5 - 2, k % 5 - 2
            a, b = dy % 2, dx % 2
            p, q = (dy - a) // 2, (dx - b) // 2
            start = M + p * Wo + q                        # static offset
            term = wd[:, k:k + 1] * pad_ref[2 * a + b, :, start:start + L]
            key = (q, a)
            parts[key] = term if key not in parts else parts[key] + term
        gm1 = jnp.where(col >= 1, parts[(-1, 0)] + parts[(-1, 1)], 0.0)
        g0 = parts[(0, 0)] + parts[(0, 1)]
        gp1 = jnp.where(col < Wo - 1, parts[(1, 0)] + parts[(1, 1)], 0.0)
        return (gm1 + g0) + gp1

    xp = xp_ref[0]                                        # (Cin, 4L) f32

    # Halos re-zeroed each step (megacore-safe); interiors fully rewritten.
    pad1_ref[:, :, :M] = jnp.zeros((4, cin, M), jnp.float32)
    pad1_ref[:, :, M + L:] = jnp.zeros((4, cin, M), jnp.float32)
    pad2_ref[:, :, :M] = jnp.zeros((4, cb, M), jnp.float32)
    pad2_ref[:, :, M + L:] = jnp.zeros((4, cb, M), jnp.float32)

    # ---- branch1: dw5x5 (stride 2) + BN  ->  1x1 + BN + ReLU ----
    for ph in range(4):
        pad1_ref[ph, :, M:M + L] = xp[:, ph * L:(ph + 1) * L]
    z1 = dw5x5_stride2(pad1_ref, wd1_ref[...]) + bd1_ref[...]
    o1 = jnp.dot(w11_ref[...], z1.astype(jnp.bfloat16),
                 preferred_element_type=jnp.float32)
    o_ref[0, :, :L] = jnp.maximum(o1 + b11_ref[...], 0.0).astype(o_ref.dtype)

    # ---- branch2: one fused 1x1+BN+ReLU over all 4 phases
    #               -> dw5x5(s2)+BN -> 1x1+BN+ReLU ----
    y = jnp.dot(w21_ref[...], xp.astype(jnp.bfloat16),
                preferred_element_type=jnp.float32)       # (Cb, 4L)
    y = jnp.maximum(y + b21_ref[...], 0.0)
    for ph in range(4):
        pad2_ref[ph, :, M:M + L] = y[:, ph * L:(ph + 1) * L]
    z2 = dw5x5_stride2(pad2_ref, wd2_ref[...]) + bd2_ref[...]
    o2 = jnp.dot(w22_ref[...], z2.astype(jnp.bfloat16),
                 preferred_element_type=jnp.float32)
    o_ref[0, :, L:] = jnp.maximum(o2 + b22_ref[...], 0.0).astype(o_ref.dtype)


# --------------------------------------------------------------------------
# pallas_call wrappers
# --------------------------------------------------------------------------
def _bcast_spec(shape):
    return pl.BlockSpec(shape, lambda n: (0,) * len(shape))


_COMPILER_PARAMS = pltpu.CompilerParams(
    dimension_semantics=("parallel",),
    vmem_limit_bytes=48 * 1024 * 1024,   # <= ~56 MiB so it also fits v7x
)


def _run_unit_s1(xs, p, H, W):
    # xs: (N, 2, Cb, L) float32, L = H*W
    N, _, cb, L = xs.shape
    M = 2 * W + 2
    kernel = functools.partial(_unit_s1_kernel, H=H, W=W)
    return pl.pallas_call(
        kernel,
        out_shape=jax.ShapeDtypeStruct((N, cb, 2 * L), xs.dtype),
        grid=(N,),
        in_specs=[
            pl.BlockSpec((1, 2, cb, L), lambda n: (n, 0, 0, 0)),
            _bcast_spec((cb, cb)), _bcast_spec((cb, 1)),
            _bcast_spec((cb, 25)), _bcast_spec((cb, 1)),
            _bcast_spec((cb, cb)), _bcast_spec((cb, 1)),
        ],
        out_specs=pl.BlockSpec((1, cb, 2 * L), lambda n: (n, 0, 0)),
        scratch_shapes=[pltpu.VMEM((cb, L + 2 * M), jnp.float32)],
        compiler_params=_COMPILER_PARAMS,
    )(xs,
      p["w1"].astype(jnp.bfloat16), p["b1"],
      p["wd"], p["bd"],
      p["w2"].astype(jnp.bfloat16), p["b2"])


def _run_unit_s2(xp, p1, p2, Ho, Wo):
    # xp: (N, Cin, 4*L) float32 polyphase planes (lane-concatenated), L = Ho*Wo
    N, cin, L4 = xp.shape
    L = L4 // 4
    cb = p2["w2"].shape[0]
    M = Wo + 1
    kernel = functools.partial(_unit_s2_kernel, Ho=Ho, Wo=Wo)
    return pl.pallas_call(
        kernel,
        out_shape=jax.ShapeDtypeStruct((N, cb, 2 * L), xp.dtype),
        grid=(N,),
        in_specs=[
            pl.BlockSpec((1, cin, 4 * L), lambda n: (n, 0, 0)),
            _bcast_spec((cin, 25)), _bcast_spec((cin, 1)),
            _bcast_spec((cb, cin)), _bcast_spec((cb, 1)),
            _bcast_spec((cb, cin)), _bcast_spec((cb, 1)),
            _bcast_spec((cb, 25)), _bcast_spec((cb, 1)),
            _bcast_spec((cb, cb)), _bcast_spec((cb, 1)),
        ],
        out_specs=pl.BlockSpec((1, cb, 2 * L), lambda n: (n, 0, 0)),
        scratch_shapes=[
            pltpu.VMEM((4, cin, L + 2 * M), jnp.float32),
            pltpu.VMEM((4, cb, L + 2 * M), jnp.float32),
        ],
        compiler_params=_COMPILER_PARAMS,
    )(xp,
      p1["wd"], p1["bd"], p1["w1"].astype(jnp.bfloat16), p1["b1"],
      p2["w1"].astype(jnp.bfloat16), p2["b1"], p2["wd"], p2["bd"],
      p2["w2"].astype(jnp.bfloat16), p2["b2"])


# --------------------------------------------------------------------------
# Module-level forward (only free reshapes / one cheap polyphase split)
# --------------------------------------------------------------------------
def shuffle_v2_basic_unit(x, params, stride):
    """x: (N, C, H, W) float32 NCHW -> NCHW output, matches the PyTorch module."""
    N, C, H, W = x.shape
    if stride == 1:
        cb = C // 2
        xs = x.reshape(N, 2, cb, H * W)                # free reshape (chunk(2, dim=1))
        out = _run_unit_s1(xs, params["branch2"], H, W)     # (N, cb, 2*L) interleaved
        return out.reshape(N, C, H, W)                 # free reshape
    else:
        assert H % 2 == 0 and W % 2 == 0, "stride-2 unit requires even H, W"
        Ho, Wo = H // 2, W // 2
        # polyphase split: xp[n, c, 2a+b, i*Wo+j] = x[n, c, 2i+a, 2j+b]
        xp = jnp.transpose(x.reshape(N, C, Ho, 2, Wo, 2), (0, 1, 3, 5, 2, 4))
        xp = xp.reshape(N, C, 4 * Ho * Wo)
        out = _run_unit_s2(xp, params["branch1"], params["branch2"], Ho, Wo)
        cb = out.shape[1]
        return out.reshape(N, 2 * cb, Ho, Wo)          # free reshape


# --------------------------------------------------------------------------
# Deterministic parameter construction (BN folded into convs, eval mode)
# --------------------------------------------------------------------------
def init_params(key, stride, in_channels, out_channels):
    eps = 1e-5
    if stride == 2:
        cin = in_channels
        cb = out_channels // 2
    else:
        cin = in_channels // 2
        cb = cin
    keys = jax.random.split(key, 10)

    def bn_fold(k, c):
        kg, kb, km, kv = jax.random.split(k, 4)
        gamma = 1.0 + 0.1 * jax.random.normal(kg, (c,))
        beta = 0.1 * jax.random.normal(kb, (c,))
        mean = 0.1 * jax.random.normal(km, (c,))
        var = 1.0 + 0.1 * jax.random.uniform(kv, (c,))
        scale = gamma / jnp.sqrt(var + eps)
        bias = beta - mean * scale
        return scale.astype(jnp.float32), bias.astype(jnp.float32)

    params = {}
    # --- branch2: 1x1+BN+ReLU, dw5x5+BN, 1x1+BN+ReLU ---
    w1 = 0.3 * jax.random.normal(keys[0], (cb, cin), jnp.float32)   # (out, in)
    s1, b1 = bn_fold(keys[1], cb)
    wd = 0.3 * jax.random.normal(keys[2], (cb, 25), jnp.float32)    # (ch, tap)
    s2, b2 = bn_fold(keys[3], cb)
    w2 = 0.3 * jax.random.normal(keys[4], (cb, cb), jnp.float32)
    s3, b3 = bn_fold(keys[5], cb)
    params["branch2"] = dict(
        w1=w1 * s1[:, None], b1=b1.reshape(cb, 1),
        wd=wd * s2[:, None], bd=b2.reshape(cb, 1),
        w2=w2 * s3[:, None], b2=b3.reshape(cb, 1),
    )
    # --- branch1 (stride=2 only): dw5x5+BN, 1x1+BN+ReLU ---
    if stride == 2:
        wd1 = 0.3 * jax.random.normal(keys[6], (cin, 25), jnp.float32)
        sA, bA = bn_fold(keys[7], cin)
        w11 = 0.3 * jax.random.normal(keys[8], (cb, cin), jnp.float32)
        sB, bB = bn_fold(keys[9], cb)
        params["branch1"] = dict(
            wd=wd1 * sA[:, None], bd=bA.reshape(cin, 1),
            w1=w11 * sB[:, None], b1=bB.reshape(cb, 1),
        )
    return params


# --------------------------------------------------------------------------
# Pure-JAX reference (NCHW, f32 HIGHEST) using the same folded parameters
# --------------------------------------------------------------------------
def _conv1x1_ref(x, w):
    return jnp.einsum('oc,nchw->nohw', w, x, precision=_HIGHEST)


def _dwconv5x5_ref(x, w, stride):
    C = x.shape[1]
    return jax.lax.conv_general_dilated(
        x, w.reshape(C, 1, 5, 5), window_strides=(stride, stride),
        padding=((2, 2), (2, 2)), feature_group_count=C,
        dimension_numbers=('NCHW', 'OIHW', 'NCHW'), precision=_HIGHEST)


def _ref_forward(x, params, stride):
    p2 = params["branch2"]

    def branch2(z):
        y = jax.nn.relu(_conv1x1_ref(z, p2["w1"]) + p2["b1"].reshape(1, -1, 1, 1))
        y = _dwconv5x5_ref(y, p2["wd"], stride) + p2["bd"].reshape(1, -1, 1, 1)
        return jax.nn.relu(_conv1x1_ref(y, p2["w2"]) + p2["b2"].reshape(1, -1, 1, 1))

    if stride == 1:
        C = x.shape[1]
        out = jnp.concatenate([x[:, :C // 2], branch2(x[:, C // 2:])], axis=1)
    else:
        p1 = params["branch1"]
        b1 = _dwconv5x5_ref(x, p1["wd"], stride) + p1["bd"].reshape(1, -1, 1, 1)
        b1 = jax.nn.relu(_conv1x1_ref(b1, p1["w1"]) + p1["b1"].reshape(1, -1, 1, 1))
        out = jnp.concatenate([b1, branch2(x)], axis=1)
    n, c, h, w = out.shape
    # channel_shuffle(g=2) (square spatial maps, identical to the PyTorch view trick)
    return out.reshape(n, 2, c // 2, h, w).transpose(0, 2, 1, 3, 4).reshape(n, c, h, w)


# --------------------------------------------------------------------------
if __name__ == "__main__":
    key = jax.random.PRNGKey(0)
    kx, kp1, kp2 = jax.random.split(key, 3)

    # Small NCHW input consistent with the module.
    x = jax.random.normal(kx, (2, 8, 16, 16), jnp.float32)

    fwd = jax.jit(shuffle_v2_basic_unit, static_argnames=("stride",))

    # bf16 single-pass MXU matmuls in the kernel vs f32 HIGHEST reference
    # -> slightly relaxed tolerance (as recommended in the perf review).
    ATOL = RTOL = 5e-2

    # stride=1 unit (in_channels=out_channels=8) -> same-shape output
    p1 = init_params(kp1, stride=1, in_channels=8, out_channels=8)
    out1 = jax.block_until_ready(fwd(x, p1, stride=1))
    assert out1.shape == (2, 8, 16, 16), out1.shape
    ref1 = _ref_forward(x, p1, 1)
    err1 = float(jnp.max(jnp.abs(out1 - ref1)))
    assert jnp.allclose(out1, ref1, atol=ATOL, rtol=RTOL), err1

    # stride=2 unit (in_channels=8, out_channels=16) -> spatial halved
    p2 = init_params(kp2, stride=2, in_channels=8, out_channels=16)
    out2 = jax.block_until_ready(fwd(x, p2, stride=2))
    assert out2.shape == (2, 16, 8, 8), out2.shape
    ref2 = _ref_forward(x, p2, 2)
    err2 = float(jnp.max(jnp.abs(out2 - ref2)))
    assert jnp.allclose(out2, ref2, atol=ATOL, rtol=RTOL), err2

    print("KERNEL_OK")
</pallas_src>

<mosaic_0001>
module attributes {stable_mosaic.version = 11 : i64} {
  func.func @_unit_s1_kernel(%arg0: i32, %arg1: memref<1x2x4x256xf32, #tpu.memory_space<vmem>>, %arg2: memref<4x4xbf16, #tpu.memory_space<vmem>>, %arg3: memref<4x1xf32, #tpu.memory_space<vmem>>, %arg4: memref<4x25xf32, #tpu.memory_space<vmem>>, %arg5: memref<4x1xf32, #tpu.memory_space<vmem>>, %arg6: memref<4x4xbf16, #tpu.memory_space<vmem>>, %arg7: memref<4x1xf32, #tpu.memory_space<vmem>>, %arg8: memref<1x4x512xf32, #tpu.memory_space<vmem>>, %arg9: memref<4x324xf32, #tpu.memory_space<vmem>>) attributes {dimension_semantics = [#tpu.dimension_semantics<parallel>], iteration_bounds = array<i64: 2>, scalar_prefetch = 0 : i64, scratch_operands = 1 : i64, tpu.core_type = #tpu.core_type<tc>, window_params = [{transform_indices = @transform_0, window_bounds = array<i64: 1, 2, 4, 256>}, {pipeline_mode = #tpu.pipeline_mode<synchronous>, transform_indices = @transform_1, window_bounds = array<i64: 4, 4>}, {pipeline_mode = #tpu.pipeline_mode<synchronous>, transform_indices = @transform_2, window_bounds = array<i64: 4, 1>}, {pipeline_mode = #tpu.pipeline_mode<synchronous>, transform_indices = @transform_3, window_bounds = array<i64: 4, 25>}, {pipeline_mode = #tpu.pipeline_mode<synchronous>, transform_indices = @transform_4, window_bounds = array<i64: 4, 1>}, {pipeline_mode = #tpu.pipeline_mode<synchronous>, transform_indices = @transform_5, window_bounds = array<i64: 4, 4>}, {pipeline_mode = #tpu.pipeline_mode<synchronous>, transform_indices = @transform_6, window_bounds = array<i64: 4, 1>}, {transform_indices = @transform_7, window_bounds = array<i64: 1, 4, 512>}]} {
    %c0 = arith.constant 0 : index
    %c0_0 = arith.constant 0 : index
    %c0_1 = arith.constant 0 : index
    %c0_2 = arith.constant 0 : index
    %0 = vector.load %arg1[%c0, %c0_0, %c0_1, %c0_2] : memref<1x2x4x256xf32, #tpu.memory_space<vmem>>, vector<1x1x4x256xf32>
    %1 = vector.shape_cast %0 : vector<1x1x4x256xf32> to vector<4x256xf32>
    %c0_3 = arith.constant 0 : index
    %c0_4 = arith.constant 0 : index
    %c0_5 = arith.constant 0 : index
    %2 = vector.load %arg8[%c0_3, %c0_4, %c0_5] : memref<1x4x512xf32, #tpu.memory_space<vmem>>, vector<1x4x256xf32>
    %3 = vector.shape_cast %2 : vector<1x4x256xf32> to vector<4x256xf32>
    %4 = vector.shape_cast %1 : vector<4x256xf32> to vector<1x4x256xf32>
    tpu.vector_store %arg8[%c0_3, %c0_4, %c0_5], %4 {strides = array<i32>} : memref<1x4x512xf32, #tpu.memory_space<vmem>>, vector<1x4x256xf32>,
    %c0_6 = arith.constant 0 : index
    %c0_7 = arith.constant 0 : index
    %5 = vector.load %arg2[%c0_6, %c0_7] : memref<4x4xbf16, #tpu.memory_space<vmem>>, vector<4x4xbf16>
    %c0_8 = arith.constant 0 : index
    %c1 = arith.constant 1 : index
    %c0_9 = arith.constant 0 : index
    %c0_10 = arith.constant 0 : index
    %6 = vector.load %arg1[%c0_8, %c1, %c0_9, %c0_10] : memref<1x2x4x256xf32, #tpu.memory_space<vmem>>, vector<1x1x4x256xf32>
    %7 = vector.shape_cast %6 : vector<1x1x4x256xf32> to vector<4x256xf32>
    %8 = arith.truncf %7 : vector<4x256xf32> to vector<4x256xbf16>
    %cst = arith.constant dense<0.000000e+00> : vector<4x256xf32>
    %9 = tpu.matmul %5, %8, %cst {dimension_numbers = #tpu.dot_dimension_numbers<[1], [0], [0], [1], [0, 0, 1, 1], [], []>} : vector<4x4xbf16>, vector<4x256xbf16>, vector<4x256xf32> -> vector<4x256xf32>
    %c0_11 = arith.constant 0 : index
    %c0_12 = arith.constant 0 : index
    %10 = vector.load %arg3[%c0_11, %c0_12] : memref<4x1xf32, #tpu.memory_space<vmem>>, vector<4x1xf32>
    %11 = vector.broadcast %10 : vector<4x1xf32> to vector<4x256xf32>
    %12 = arith.addf %9, %11 : vector<4x256xf32>
    %cst_13 = arith.constant 0.000000e+00 : f32
    %13 = vector.broadcast %cst_13 : f32 to vector<4x256xf32>
    %14 = arith.maximumf %12, %13 : vector<4x256xf32>
    %cst_14 = arith.constant 0.000000e+00 : f32
    %15 = vector.broadcast %cst_14 : f32 to vector<4x34xf32>
    %c0_15 = arith.constant 0 : index
    %c0_16 = arith.constant 0 : index
    %16 = vector.load %arg9[%c0_15, %c0_16] : memref<4x324xf32, #tpu.memory_space<vmem>>, vector<4x34xf32>
    tpu.vector_store %arg9[%c0_15, %c0_16], %15 {strides = array<i32>} : memref<4x324xf32, #tpu.memory_space<vmem>>, vector<4x34xf32>,
    %cst_17 = arith.constant 0.000000e+00 : f32
    %17 = vector.broadcast %cst_17 : f32 to vector<4x34xf32>
    %c0_18 = arith.constant 0 : index
    %c290 = arith.constant 290 : index
    %18 = vector.load %arg9[%c0_18, %c290] : memref<4x324xf32, #tpu.memory_space<vmem>>, vector<4x34xf32>
    tpu.vector_store %arg9[%c0_18, %c290], %17 {strides = array<i32>} : memref<4x324xf32, #tpu.memory_space<vmem>>, vector<4x34xf32>,
    %c0_19 = arith.constant 0 : index
    %c34 = arith.constant 34 : index
    %19 = vector.load %arg9[%c0_19, %c34] : memref<4x324xf32, #tpu.memory_space<vmem>>, vector<4x256xf32>
    tpu.vector_store %arg9[%c0_19, %c34], %14 {strides = array<i32>} : memref<4x324xf32, #tpu.memory_space<vmem>>, vector<4x256xf32>,
    %20 = tpu.iota {dimensions = array<i32: 1>} : vector<1x256xi32>
    %c16_i32 = arith.constant 16 : i32
    %c0_i32 = arith.constant 0 : i32
    %21 = arith.cmpi eq, %c16_i32, %c0_i32 : i32
    %c1_i32 = arith.constant 1 : i32
    %22 = arith.select %21, %c1_i32, %c16_i32 : i32
    %23 = vector.broadcast %22 : i32 to vector<1x256xi32>
    %24 = arith.remsi %20, %23 : vector<1x256xi32>
    %c0_i32_20 = arith.constant 0 : i32
    %25 = vector.broadcast %c0_i32_20 : i32 to vector<1x256xi32>
    %26 = arith.cmpi ne, %24, %25 : vector<1x256xi32>
    %c0_i32_21 = arith.constant 0 : i32
    %27 = vector.broadcast %c0_i32_21 : i32 to vector<1x256xi32>
    %28 = arith.cmpi slt, %24, %27 : vector<1x256xi32>
    %c0_i32_22 = arith.constant 0 : i32
    %29 = arith.cmpi slt, %22, %c0_i32_22 : i32
    %30 = vector.broadcast %29 : i1 to vector<1x256xi1>
    %31 = vector.broadcast %30 : vector<1x256xi1> to vector<1x256xi1>
    %32 = arith.xori %28, %31 : vector<1x256xi1>
    %33 = arith.andi %32, %26 : vector<1x256xi1>
    %34 = vector.broadcast %22 : i32 to vector<1x256xi32>
    %35 = arith.addi %24, %34 : vector<1x256xi32>
    %36 = arith.select %33, %35, %24 : vector<1x256xi1>, vector<1x256xi32>
    %c0_23 = arith.constant 0 : index
    %c0_24 = arith.constant 0 : index
    %37 = vector.load %arg4[%c0_23, %c0_24] : memref<4x25xf32, #tpu.memory_space<vmem>>, vector<4x25xf32>
    %38 = vector.extract_strided_slice %37 {offsets = [0, 0], sizes = [4, 1], strides = [1, 1]} : vector<4x25xf32> to vector<4x1xf32>
    %c0_25 = arith.constant 0 : index
    %c0_26 = arith.constant 0 : index
    %39 = vector.load %arg9[%c0_25, %c0_26] : memref<4x324xf32, #tpu.memory_space<vmem>>, vector<4x256xf32>
    %40 = vector.broadcast %38 : vector<4x1xf32> to vector<4x256xf32>
    %41 = arith.mulf %40, %39 : vector<4x256xf32>
    %42 = vector.extract_strided_slice %37 {offsets = [0, 1], sizes = [4, 1], strides = [1, 1]} : vector<4x25xf32> to vector<4x1xf32>
    %c0_27 = arith.constant 0 : index
    %c1_28 = arith.constant 1 : index
    %43 = vector.load %arg9[%c0_27, %c1_28] : memref<4x324xf32, #tpu.memory_space<vmem>>, vector<4x256xf32>
    %44 = vector.broadcast %42 : vector<4x1xf32> to vector<4x256xf32>
    %45 = arith.mulf %44, %43 : vector<4x256xf32>
    %46 = vector.extract_strided_slice %37 {offsets = [0, 2], sizes = [4, 1], strides = [1, 1]} : vector<4x25xf32> to vector<4x1xf32>
    %c0_29 = arith.constant 0 : index
    %c2 = arith.constant 2 : index
    %47 = vector.load %arg9[%c0_29, %c2] : memref<4x324xf32, #tpu.memory_space<vmem>>, vector<4x256xf32>
    %48 = vector.broadcast %46 : vector<4x1xf32> to vector<4x256xf32>
    %49 = arith.mulf %48, %47 : vector<4x256xf32>
    %50 = vector.extract_strided_slice %37 {offsets = [0, 3], sizes = [4, 1], strides = [1, 1]} : vector<4x25xf32> to vector<4x1xf32>
    %c0_30 = arith.constant 0 : index
    %c3 = arith.constant 3 : index
    %51 = vector.load %arg9[%c0_30, %c3] : memref<4x324xf32, #tpu.memory_space<vmem>>, vector<4x256xf32>
    %52 = vector.broadcast %50 : vector<4x1xf32> to vector<4x256xf32>
    %53 = arith.mulf %52, %51 : vector<4x256xf32>
    %54 = vector.extract_strided_slice %37 {offsets = [0, 4], sizes = [4, 1], strides = [1, 1]} : vector<4x25xf32> to vector<4x1xf32>
    %c0_31 = arith.constant 0 : index
    %c4 = arith.constant 4 : index
    %55 = vector.load %arg9[%c0_31, %c4] : memref<4x324xf32, #tpu.memory_space<vmem>>, vector<4x256xf32>
    %56 = vector.broadcast %54 : vector<4x1xf32> to vector<4x256xf32>
    %57 = arith.mulf %56, %55 : vector<4x256xf32>
    %58 = vector.extract_strided_slice %37 {offsets = [0, 5], sizes = [4, 1], strides = [1, 1]} : vector<4x25xf32> to vector<4x1xf32>
    %c0_32 = arith.constant 0 : index
    %c16 = arith.constant 16 : index
    %59 = vector.load %arg9[%c0_32, %c16] : memref<4x324xf32, #tpu.memory_space<vmem>>, vector<4x256xf32>
    %60 = vector.broadcast %58 : vector<4x1xf32> to vector<4x256xf32>
    %61 = arith.mulf %60, %59 : vector<4x256xf32>
    %62 = arith.addf %41, %61 : vector<4x256xf32>
    %63 = vector.extract_strided_slice %37 {offsets = [0, 6], sizes = [4, 1], strides = [1, 1]} : vector<4x25xf32> to vector<4x1xf32>
    %c0_33 = arith.constant 0 : index
    %c17 = arith.constant 17 : index
    %64 = vector.load %arg9[%c0_33, %c17] : memref<4x324xf32, #tpu.memory_space<vmem>>, vector<4x256xf32>
    %65 = vector.broadcast %63 : vector<4x1xf32> to vector<4x256xf32>
    %66 = arith.mulf %65, %64 : vector<4x256xf32>
    %67 = arith.addf %45, %66 : vector<4x256xf32>
    %68 = vector.extract_strided_slice %37 {offsets = [0, 7], sizes = [4, 1], strides = [1, 1]} : vector<4x25xf32> to vector<4x1xf32>
    %c0_34 = arith.constant 0 : index
    %c18 = arith.constant 18 : index
    %69 = vector.load %arg9[%c0_34, %c18] : memref<4x324xf32, #tpu.memory_space<vmem>>, vector<4x256xf32>
    %70 = vector.broadcast %68 : vector<4x1xf32> to vector<4x256xf32>
    %71 = arith.mulf %70, %69 : vector<4x256xf32>
    %72 = arith.addf %49, %71 : vector<4x256xf32>
    %73 = vector.extract_strided_slice %37 {offsets = [0, 8], sizes = [4, 1], strides = [1, 1]} : vector<4x25xf32> to vector<4x1xf32>
    %c0_35 = arith.constant 0 : index
    %c19 = arith.constant 19 : index
    %74 = vector.load %arg9[%c0_35, %c19] : memref<4x324xf32, #tpu.memory_space<vmem>>, vector<4x256xf32>
    %75 = vector.broadcast %73 : vector<4x1xf32> to vector<4x256xf32>
    %76 = arith.mulf %75, %74 : vector<4x256xf32>
    %77 = arith.addf %53, %76 : vector<4x256xf32>
    %78 = vector.extract_strided_slice %37 {offsets = [0, 9], sizes = [4, 1], strides = [1, 1]} : vector<4x25xf32> to vector<4x1xf32>
    %c0_36 = arith.constant 0 : index
    %c20 = arith.constant 20 : index
    %79 = vector.load %arg9[%c0_36, %c20] : memref<4x324xf32, #tpu.memory_space<vmem>>, vector<4x256xf32>
    %80 = vector.broadcast %78 : vector<4x1xf32> to vector<4x256xf32>
    %81 = arith.mulf %80, %79 : vector<4x256xf32>
    %82 = arith.addf %57, %81 : vector<4x256xf32>
    %83 = vector.extract_strided_slice %37 {offsets = [0, 10], sizes = [4, 1], strides = [1, 1]} : vector<4x25xf32> to vector<4x1xf32>
    %c0_37 = arith.constant 0 : index
    %c32 = arith.constant 32 : index
    %84 = vector.load %arg9[%c0_37, %c32] : memref<4x324xf32, #tpu.memory_space<vmem>>, vector<4x256xf32>
    %85 = vector.broadcast %83 : vector<4x1xf32> to vector<4x256xf32>
    %86 = arith.mulf %85, %84 : vector<4x256xf32>
    %87 = arith.addf %62, %86 : vector<4x256xf32>
    %88 = vector.extract_strided_slice %37 {offsets = [0, 11], sizes = [4, 1], strides = [1, 1]} : vector<4x25xf32> to vector<4x1xf32>
    %c0_38 = arith.constant 0 : index
    %c33 = arith.constant 33 : index
    %89 = vector.load %arg9[%c0_38, %c33] : memref<4x324xf32, #tpu.memory_space<vmem>>, vector<4x256xf32>
    %90 = vector.broadcast %88 : vector<4x1xf32> to vector<4x256xf32>
    %91 = arith.mulf %90, %89 : vector<4x256xf32>
    %92 = arith.addf %67, %91 : vector<4x256xf32>
    %93 = vector.extract_strided_slice %37 {offsets = [0, 12], sizes = [4, 1], strides = [1, 1]} : vector<4x25xf32> to vector<4x1xf32>
    %c0_39 = arith.constant 0 : index
    %c34_40 = arith.constant 34 : index
    %94 = vector.load %arg9[%c0_39, %c34_40] : memref<4x324xf32, #tpu.memory_space<vmem>>, vector<4x256xf32>
    %95 = vector.broadcast %93 : vector<4x1xf32> to vector<4x256xf32>
    %96 = arith.mulf %95, %94 : vector<4x256xf32>
    %97 = arith.addf %72, %96 : vector<4x256xf32>
    %98 = vector.extract_strided_slice %37 {offsets = [0, 13], sizes = [4, 1], strides = [1, 1]} : vector<4x25xf32> to vector<4x1xf32>
    %c0_41 = arith.constant 0 : index
    %c35 = arith.constant 35 : index
    %99 = vector.load %arg9[%c0_41, %c35] : memref<4x324xf32, #tpu.memory_space<vmem>>, vector<4x256xf32>
    %100 = vector.broadcast %98 : vector<4x1xf32> to vector<4x256xf32>
    %101 = arith.mulf %100, %99 : vector<4x256xf32>
    %102 = arith.addf %77, %101 : vector<4x256xf32>
    %103 = vector.extract_strided_slice %37 {offsets = [0, 14], sizes = [4, 1], strides = [1, 1]} : vector<4x25xf32> to vector<4x1xf32>
    %c0_42 = arith.constant 0 : index
    %c36 = arith.constant 36 : index
    %104 = vector.load %arg9[%c0_42, %c36] : memref<4x324xf32, #tpu.memory_space<vmem>>, vector<4x256xf32>
    %105 = vector.broadcast %103 : vector<4x1xf32> to vector<4x256xf32>
    %106 = arith.mulf %105, %104 : vector<4x256xf32>
    %107 = arith.addf %82, %106 : vector<4x256xf32>
    %108 = vector.extract_strided_slice %37 {offsets = [0, 15], sizes = [4, 1], strides = [1, 1]} : vector<4x25xf32> to vector<4x1xf32>
    %c0_43 = arith.constant 0 : index
    %c48 = arith.constant 48 : index
    %109 = vector.load %arg9[%c0_43, %c48] : memref<4x324xf32, #tpu.memory_space<vmem>>, vector<4x256xf32>
    %110 = vector.broadcast %108 : vector<4x1xf32> to vector<4x256xf32>
    %111 = arith.mulf %110, %109 : vector<4x256xf32>
    %112 = arith.addf %87, %111 : vector<4x256xf32>
    %113 = vector.extract_strided_slice %37 {offsets = [0, 16], sizes = [4, 1], strides = [1, 1]} : vector<4x25xf32> to vector<4x1xf32>
    %c0_44 = arith.constant 0 : index
    %c49 = arith.constant 49 : index
    %114 = vector.load %arg9[%c0_44, %c49] : memref<4x324xf32, #tpu.memory_space<vmem>>, vector<4x256xf32>
    %115 = vector.broadcast %113 : vector<4x1xf32> to vector<4x256xf32>
    %116 = arith.mulf %115, %114 : vector<4x256xf32>
    %117 = arith.addf %92, %116 : vector<4x256xf32>
    %118 = vector.extract_strided_slice %37 {offsets = [0, 17], sizes = [4, 1], strides = [1, 1]} : vector<4x25xf32> to vector<4x1xf32>
    %c0_45 = arith.constant 0 : index
    %c50 = arith.constant 50 : index
    %119 = vector.load %arg9[%c0_45, %c50] : memref<4x324xf32, #tpu.memory_space<vmem>>, vector<4x256xf32>
    %120 = vector.broadcast %118 : vector<4x1xf32> to vector<4x256xf32>
    %121 = arith.mulf %120, %119 : vector<4x256xf32>
    %122 = arith.addf %97, %121 : vector<4x256xf32>
    %123 = vector.extract_strided_slice %37 {offsets = [0, 18], sizes = [4, 1], strides = [1, 1]} : vector<4x25xf32> to vector<4x1xf32>
    %c0_46 = arith.constant 0 : index
    %c51 = arith.constant 51 : index
    %124 = vector.load %arg9[%c0_46, %c51] : memref<4x324xf32, #tpu.memory_space<vmem>>, vector<4x256xf32>
    %125 = vector.broadcast %123 : vector<4x1xf32> to vector<4x256xf32>
    %126 = arith.mulf %125, %124 : vector<4x256xf32>
    %127 = arith.addf %102, %126 : vector<4x256xf32>
    %128 = vector.extract_strided_slice %37 {offsets = [0, 19], sizes = [4, 1], strides = [1, 1]} : vector<4x25xf32> to vector<4x1xf32>
    %c0_47 = arith.constant 0 : index
    %c52 = arith.constant 52 : index
    %129 = vector.load %arg9[%c0_47, %c52] : memref<4x324xf32, #tpu.memory_space<vmem>>, vector<4x256xf32>
    %130 = vector.broadcast %128 : vector<4x1xf32> to vector<4x256xf32>
    %131 = arith.mulf %130, %129 : vector<4x256xf32>
    %132 = arith.addf %107, %131 : vector<4x256xf32>
    %133 = vector.extract_strided_slice %37 {offsets = [0, 20], sizes = [4, 1], strides = [1, 1]} : vector<4x25xf32> to vector<4x1xf32>
    %c0_48 = arith.constant 0 : index
    %c64 = arith.constant 64 : index
    %134 = vector.load %arg9[%c0_48, %c64] : memref<4x324xf32, #tpu.memory_space<vmem>>, vector<4x256xf32>
    %135 = vector.broadcast %133 : vector<4x1xf32> to vector<4x256xf32>
    %136 = arith.mulf %135, %134 : vector<4x256xf32>
    %137 = arith.addf %112, %136 : vector<4x256xf32>
    %138 = vector.extract_strided_slice %37 {offsets = [0, 21], sizes = [4, 1], strides = [1, 1]} : vector<4x25xf32> to vector<4x1xf32>
    %c0_49 = arith.constant 0 : index
    %c65 = arith.constant 65 : index
    %139 = vector.load %arg9[%c0_49, %c65] : memref<4x324xf32, #tpu.memory_space<vmem>>, vector<4x256xf32>
    %140 = vector.broadcast %138 : vector<4x1xf32> to vector<4x256xf32>
    %141 = arith.mulf %140, %139 : vector<4x256xf32>
    %142 = arith.addf %117, %141 : vector<4x256xf32>
    %143 = vector.extract_strided_slice %37 {offsets = [0, 22], sizes = [4, 1], strides = [1, 1]} : vector<4x25xf32> to vector<4x1xf32>
    %c0_50 = arith.constant 0 : index
    %c66 = arith.constant 66 : index
    %144 = vector.load %arg9[%c0_50, %c66] : memref<4x324xf32, #tpu.memory_space<vmem>>, vector<4x256xf32>
    %145 = vector.broadcast %143 : vector<4x1xf32> to vector<4x256xf32>
    %146 = arith.mulf %145, %144 : vector<4x256xf32>
    %147 = arith.addf %122, %146 : vector<4x256xf32>
    %148 = vector.extract_strided_slice %37 {offsets = [0, 23], sizes = [4, 1], strides = [1, 1]} : vector<4x25xf32> to vector<4x1xf32>
    %c0_51 = arith.constant 0 : index
    %c67 = arith.constant 67 : index
    %149 = vector.load %arg9[%c0_51, %c67] : memref<4x324xf32, #tpu.memory_space<vmem>>, vector<4x256xf32>
    %150 = vector.broadcast %148 : vector<4x1xf32> to vector<4x256xf32>
    %151 = arith.mulf %150, %149 : vector<4x256xf32>
    %152 = arith.addf %127, %151 : vector<4x256xf32>
    %153 = vector.extract_strided_slice %37 {offsets = [0, 24], sizes = [4, 1], strides = [1, 1]} : vector<4x25xf32> to vector<4x1xf32>
    %c0_52 = arith.constant 0 : index
    %c68 = arith.constant 68 : index
    %154 = vector.load %arg9[%c0_52, %c68] : memref<4x324xf32, #tpu.memory_space<vmem>>, vector<4x256xf32>
    %155 = vector.broadcast %153 : vector<4x1xf32> to vector<4x256xf32>
    %156 = arith.mulf %155, %154 : vector<4x256xf32>
    %157 = arith.addf %132, %156 : vector<4x256xf32>
    %c2_i32 = arith.constant 2 : i32
    %158 = vector.broadcast %c2_i32 : i32 to vector<1x256xi32>
    %159 = arith.cmpi sge, %36, %158 : vector<1x256xi32>
    %cst_53 = arith.constant 0.000000e+00 : f32
    %160 = vector.shape_cast %159 : vector<1x256xi1> to vector<1x256xi1>
    %161 = vector.broadcast %160 : vector<1x256xi1> to vector<4x256xi1>
    %162 = vector.broadcast %cst_53 : f32 to vector<4x256xf32>
    %163 = arith.select %161, %137, %162 : vector<4x256xi1>, vector<4x256xf32>
    %c1_i32_54 = arith.constant 1 : i32
    %164 = vector.broadcast %c1_i32_54 : i32 to vector<1x256xi32>
    %165 = arith.cmpi sge, %36, %164 : vector<1x256xi32>
    %cst_55 = arith.constant 0.000000e+00 : f32
    %166 = vector.shape_cast %165 : vector<1x256xi1> to vector<1x256xi1>
    %167 = vector.broadcast %166 : vector<1x256xi1> to vector<4x256xi1>
    %168 = vector.broadcast %cst_55 : f32 to vector<4x256xf32>
    %169 = arith.select %167, %142, %168 : vector<4x256xi1>, vector<4x256xf32>
    %c15_i32 = arith.constant 15 : i32
    %170 = vector.broadcast %c15_i32 : i32 to vector<1x256xi32>
    %171 = arith.cmpi slt, %36, %170 : vector<1x256xi32>
    %cst_56 = arith.constant 0.000000e+00 : f32
    %172 = vector.shape_cast %171 : vector<1x256xi1> to vector<1x256xi1>
    %173 = vector.broadcast %172 : vector<1x256xi1> to vector<4x256xi1>
    %174 = vector.broadcast %cst_56 : f32 to vector<4x256xf32>
    %175 = arith.select %173, %152, %174 : vector<4x256xi1>, vector<4x256xf32>
    %c14_i32 = arith.constant 14 : i32
    %176 = vector.broadcast %c14_i32 : i32 to vector<1x256xi32>
    %177 = arith.cmpi slt, %36, %176 : vector<1x256xi32>
    %cst_57 = arith.constant 0.000000e+00 : f32
    %178 = vector.shape_cast %177 : vector<1x256xi1> to vector<1x256xi1>
    %179 = vector.broadcast %178 : vector<1x256xi1> to vector<4x256xi1>
    %180 = vector.broadcast %cst_57 : f32 to vector<4x256xf32>
    %181 = arith.select %179, %157, %180 : vector<4x256xi1>, vector<4x256xf32>
    %182 = arith.addf %163, %169 : vector<4x256xf32>
    %183 = arith.addf %182, %147 : vector<4x256xf32>
    %184 = arith.addf %175, %181 : vector<4x256xf32>
    %185 = arith.addf %183, %184 : vector<4x256xf32>
    %c0_58 = arith.constant 0 : index
    %c0_59 = arith.constant 0 : index
    %186 = vector.load %arg5[%c0_58, %c0_59] : memref<4x1xf32, #tpu.memory_space<vmem>>, vector<4x1xf32>
    %187 = vector.broadcast %186 : vector<4x1xf32> to vector<4x256xf32>
    %188 = arith.addf %185, %187 : vector<4x256xf32>
    %c0_60 = arith.constant 0 : index
    %c0_61 = arith.constant 0 : index
    %189 = vector.load %arg6[%c0_60, %c0_61] : memref<4x4xbf16, #tpu.memory_space<vmem>>, vector<4x4xbf16>
    %190 = arith.truncf %188 : vector<4x256xf32> to vector<4x256xbf16>
    %cst_62 = arith.constant dense<0.000000e+00> : vector<4x256xf32>
    %191 = tpu.matmul %189, %190, %cst_62 {dimension_numbers = #tpu.dot_dimension_numbers<[1], [0], [0], [1], [0, 0, 1, 1], [], []>} : vector<4x4xbf16>, vector<4x256xbf16>, vector<4x256xf32> -> vector<4x256xf32>
    %c0_63 = arith.constant 0 : index
    %c0_64 = arith.constant 0 : index
    %192 = vector.load %arg7[%c0_63, %c0_64] : memref<4x1xf32, #tpu.memory_space<vmem>>, vector<4x1xf32>
    %193 = vector.broadcast %192 : vector<4x1xf32> to vector<4x256xf32>
    %194 = arith.addf %191, %193 : vector<4x256xf32>
    %cst_65 = arith.constant 0.000000e+00 : f32
    %195 = vector.broadcast %cst_65 : f32 to vector<4x256xf32>
    %196 = arith.maximumf %194, %195 : vector<4x256xf32>
    %c0_66 = arith.constant 0 : index
    %c0_67 = arith.constant 0 : index
    %c256 = arith.constant 256 : index
    %197 = vector.load %arg8[%c0_66, %c0_67, %c256] : memref<1x4x512xf32, #tpu.memory_space<vmem>>, vector<1x4x256xf32>
    %198 = vector.shape_cast %197 : vector<1x4x256xf32> to vector<4x256xf32>
    %199 = vector.shape_cast %196 : vector<4x256xf32> to vector<1x4x256xf32>
    tpu.vector_store %arg8[%c0_66, %c0_67, %c256], %199 {strides = array<i32>} : memref<1x4x512xf32, #tpu.memory_space<vmem>>, vector<1x4x256xf32>,
    return
  }
  func.func @transform_0(%arg0: i32) -> (i32, i32, i32, i32) {
    %c0_i32 = arith.constant 0 : i32
    %c0_i32_0 = arith.constant 0 : i32
    %c0_i32_1 = arith.constant 0 : i32
    %c0_i32_2 = arith.constant 0 : i32
    return %arg0, %c0_i32, %c0_i32_0, %c0_i32_1 : i32, i32, i32, i32
  }
  func.func @transform_1(%arg0: i32) -> (i32, i32) {
    %c0_i32 = arith.constant 0 : i32
    %c0_i32_0 = arith.constant 0 : i32
    %c0_i32_1 = arith.constant 0 : i32
    return %c0_i32, %c0_i32_0 : i32, i32
  }
  func.func @transform_2(%arg0: i32) -> (i32, i32) {
    %c0_i32 = arith.constant 0 : i32
    %c0_i32_0 = arith.constant 0 : i32
    %c0_i32_1 = arith.constant 0 : i32
    return %c0_i32, %c0_i32_0 : i32, i32
  }
  func.func @transform_3(%arg0: i32) -> (i32, i32) {
    %c0_i32 = arith.constant 0 : i32
    %c0_i32_0 = arith.constant 0 : i32
    %c0_i32_1 = arith.constant 0 : i32
    return %c0_i32, %c0_i32_0 : i32, i32
  }
  func.func @transform_4(%arg0: i32) -> (i32, i32) {
    %c0_i32 = arith.constant 0 : i32
    %c0_i32_0 = arith.constant 0 : i32
    %c0_i32_1 = arith.constant 0 : i32
    return %c0_i32, %c0_i32_0 : i32, i32
  }
  func.func @transform_5(%arg0: i32) -> (i32, i32) {
    %c0_i32 = arith.constant 0 : i32
    %c0_i32_0 = arith.constant 0 : i32
    %c0_i32_1 = arith.constant 0 : i32
    return %c0_i32, %c0_i32_0 : i32, i32
  }
  func.func @transform_6(%arg0: i32) -> (i32, i32) {
    %c0_i32 = arith.constant 0 : i32
    %c0_i32_0 = arith.constant 0 : i32
    %c0_i32_1 = arith.constant 0 : i32
    return %c0_i32, %c0_i32_0 : i32, i32
  }
  func.func @transform_7(%arg0: i32) -> (i32, i32, i32) {
    %c0_i32 = arith.constant 0 : i32
    %c0_i32_0 = arith.constant 0 : i32
    %c0_i32_1 = arith.constant 0 : i32
    return %arg0, %c0_i32, %c0_i32_0 : i32, i32, i32
  }
}

</mosaic_0001>

<llo_original>
// kernel: shuffle_v2_basic_unit.1
$region0: #{shuffle_v2_basic_unit.1}
  #allocation0 [shape = 'u32[]', space=smem, size = 0x4, offset = 0x4, fixed_abs, tag = 'smem constant byte address 0x4 - core index']
  #allocation1 [shape = 'u32[72,128]{1,0:T(1,128)}', space=vmem, size = 0x9000, scoped, tag = 'internal scratch']
  #allocation2 [shape = 'f32[4,324]{1,0:T(4,128)}', space=vmem, size = 0x1800, scoped, tag = 'scratch operand']
  %s0 = inlined_call_operand.vmem [shape: f32[2,2,4,256], index: 0, kind: input, shape index: {}]
  %s1 = inlined_call_operand.vmem [shape: bf16[4,4], index: 1, kind: input, shape index: {}]
  %s2 = inlined_call_operand.vmem [shape: f32[4,1], index: 2, kind: input, shape index: {}]
  %s3 = inlined_call_operand.vmem [shape: f32[4,25], index: 3, kind: input, shape index: {}]
  %s4 = inlined_call_operand.vmem [shape: f32[4,1], index: 4, kind: input, shape index: {}]
  %s5 = inlined_call_operand.vmem [shape: bf16[4,4], index: 5, kind: input, shape index: {}]
  %s6 = inlined_call_operand.vmem [shape: f32[4,1], index: 6, kind: input, shape index: {}]
  %s7 = inlined_call_operand.vmem [shape: f32[2,4,512], index: 7, kind: output, shape index: {}]
  %s8 = sld [smem:[#allocation0]]
  $region61: #{shuffle_v2_basic_unit.1} parent=0
    _
  %s10 = ssub.s32 1, %s8
  %s11 = scalar_select 0, %s10, %s8
  loop: start=0, step=1, limit=4
  $region2: #{shuffle_v2_basic_unit.1} parent=0 // loop_pre_header
    _
  $region3: #{shuffle_v2_basic_unit.1} parent=0 // loop_header
    %s13 = sphi 0, %s17
    %p14 = scmp.ge.s32.totalorder %s13, 4
    %s23 = sphi 0, %s25
    %s26 = sphi 0, %s23
    %s27 = sphi 0, %s26
    %s43 = sphi 0, %s27
    %s47 = sphi 0, %s47
    %s49 = sphi 0, %s47
    %s50 = sphi 0, %s49
    %s64 = sphi 0, %s50
    %s68 = sphi 0, %s68
    %s70 = sphi 0, %s68
    %s71 = sphi 0, %s70
    %s85 = sphi 0, %s71
    %s89 = sphi 0, %s89
    %s91 = sphi 0, %s89
    %s92 = sphi 0, %s91
    %s106 = sphi 0, %s92
    %s110 = sphi 0, %s110
    %s112 = sphi 0, %s110
    %s113 = sphi 0, %s112
    %s127 = sphi 0, %s113
    %s131 = sphi 0, %s131
    %s133 = sphi 0, %s131
    %s134 = sphi 0, %s133
    %s148 = sphi 0, %s134
    %s152 = sphi 0, %s152
    %s154 = sphi 0, %s152
    %s155 = sphi 0, %s154
    %s169 = sphi 0, %s155
    %s175 = sphi 0, %s177
    %s178 = sphi 0, %s175
    %s179 = sphi 0, %s178
    %s195 = sphi 0, %s179
  $region4: #{shuffle_v2_basic_unit.1} parent=0 // loop_header_branch
    %16 = sbr.rel (%p14) target = $region8
  $region5: #{shuffle_v2_basic_unit.1} parent=0 // loop_body
    %s18 = ssub.s32 %s13, 1
    %s19 = ssub.s32 %s13, 2
    %s20 = sadd.s32 %s13, 1
    %s21 = ssub.s32 %s13, %s20
    %p22 = scmp.eq.s32.totalorder %s21, 0
    %s24 = sadd.s32 %s23, 1
    %s25 = scalar_select %p22, %s23, %s24
    %p28 = pneg %p22
    %p29 = scmp.eq.s32.totalorder %s13, 1
    %p30 = por %p28, %p29
    %p31 = scmp.ne.s32.totalorder %s23, %s26
    %p32 = scmp.eq.s32.totalorder %s13, 0
    %p33 = por %p31, %p32
    %p34 = scmp.ne.s32.totalorder %s23, %s26
    %p35 = scmp.eq.s32.totalorder %s18, 1
    %p36 = por %p34, %p35
    %p37 = scmp.ne.s32.totalorder %s26, %s27
    %p38 = scmp.eq.s32.totalorder %s18, 0
    %p39 = por %p37, %p38
    %p40 = scmp.ne.s32.totalorder %s26, %s27
    %p41 = scmp.eq.s32.totalorder %s19, 1
    %p42 = por %p40, %p41
    %p44 = scmp.ne.s32.totalorder %s27, %s43
    %p45 = scmp.eq.s32.totalorder %s19, 0
    %p46 = por %p44, %p45
    %s48 = sadd.s32 %s47, 1
    %p51 = scmp.eq.s32.totalorder %s13, 1
    %p52 = scmp.ne.s32.totalorder %s47, %s49
    %p53 = scmp.eq.s32.totalorder %s13, 0
    %p54 = por %p52, %p53
    %p55 = scmp.ne.s32.totalorder %s47, %s49
    %p56 = scmp.eq.s32.totalorder %s18, 1
    %p57 = por %p55, %p56
    %p58 = scmp.ne.s32.totalorder %s49, %s50
    %p59 = scmp.eq.s32.totalorder %s18, 0
    %p60 = por %p58, %p59
    %p61 = scmp.ne.s32.totalorder %s49, %s50
    %p62 = scmp.eq.s32.totalorder %s19, 1
    %p63 = por %p61, %p62
    %p65 = scmp.ne.s32.totalorder %s50, %s64
    %p66 = scmp.eq.s32.totalorder %s19, 0
    %p67 = por %p65, %p66
    %s69 = sadd.s32 %s68, 1
    %p72 = scmp.eq.s32.totalorder %s13, 1
    %p73 = scmp.ne.s32.totalorder %s68, %s70
    %p74 = scmp.eq.s32.totalorder %s13, 0
    %p75 = por %p73, %p74
    %p76 = scmp.ne.s32.totalorder %s68, %s70
    %p77 = scmp.eq.s32.totalorder %s18, 1
    %p78 = por %p76, %p77
    %p79 = scmp.ne.s32.totalorder %s70, %s71
    %p80 = scmp.eq.s32.totalorder %s18, 0
    %p81 = por %p79, %p80
    %p82 = scmp.ne.s32.totalorder %s70, %s71
    %p83 = scmp.eq.s32.totalorder %s19, 1
    %p84 = por %p82, %p83
    %p86 = scmp.ne.s32.totalorder %s71, %s85
    %p87 = scmp.eq.s32.totalorder %s19, 0
    %p88 = por %p86, %p87
    %s90 = sadd.s32 %s89, 1
    %p93 = scmp.eq.s32.totalorder %s13, 1
    %p94 = scmp.ne.s32.totalorder %s89, %s91
    %p95 = scmp.eq.s32.totalorder %s13, 0
    %p96 = por %p94, %p95
    %p97 = scmp.ne.s32.totalorder %s89, %s91
    %p98 = scmp.eq.s32.totalorder %s18, 1
    %p99 = por %p97, %p98
    %p100 = scmp.ne.s32.totalorder %s91, %s92
    %p101 = scmp.eq.s32.totalorder %s18, 0
    %p102 = por %p100, %p101
    %p103 = scmp.ne.s32.totalorder %s91, %s92
    %p104 = scmp.eq.s32.totalorder %s19, 1
    %p105 = por %p103, %p104
    %p107 = scmp.ne.s32.totalorder %s92, %s106
    %p108 = scmp.eq.s32.totalorder %s19, 0
    %p109 = por %p107, %p108
    %s111 = sadd.s32 %s110, 1
    %p114 = scmp.eq.s32.totalorder %s13, 1
    %p115 = scmp.ne.s32.totalorder %s110, %s112
    %p116 = scmp.eq.s32.totalorder %s13, 0
    %p117 = por %p115, %p116
    %p118 = scmp.ne.s32.totalorder %s110, %s112
    %p119 = scmp.eq.s32.totalorder %s18, 1
    %p120 = por %p118, %p119
    %p121 = scmp.ne.s32.totalorder %s112, %s113
    %p122 = scmp.eq.s32.totalorder %s18, 0
    %p123 = por %p121, %p122
    %p124 = scmp.ne.s32.totalorder %s112, %s113
    %p125 = scmp.eq.s32.totalorder %s19, 1
    %p126 = por %p124, %p125
    %p128 = scmp.ne.s32.totalorder %s113, %s127
    %p129 = scmp.eq.s32.totalorder %s19, 0
    %p130 = por %p128, %p129
    %s132 = sadd.s32 %s131, 1
    %p135 = scmp.eq.s32.totalorder %s13, 1
    %p136 = scmp.ne.s32.totalorder %s131, %s133
    %p137 = scmp.eq.s32.totalorder %s13, 0
    %p138 = por %p136, %p137
    %p139 = scmp.ne.s32.totalorder %s131, %s133
    %p140 = scmp.eq.s32.totalorder %s18, 1
    %p141 = por %p139, %p140
    %p142 = scmp.ne.s32.totalorder %s133, %s134
    %p143 = scmp.eq.s32.totalorder %s18, 0
    %p144 = por %p142, %p143
    %p145 = scmp.ne.s32.totalorder %s133, %s134
    %p146 = scmp.eq.s32.totalorder %s19, 1
    %p147 = por %p145, %p146
    %p149 = scmp.ne.s32.totalorder %s134, %s148
    %p150 = scmp.eq.s32.totalorder %s19, 0
    %p151 = por %p149, %p150
    %s153 = sadd.s32 %s152, 1
    %p156 = scmp.eq.s32.totalorder %s13, 1
    %p157 = scmp.ne.s32.totalorder %s152, %s154
    %p158 = scmp.eq.s32.totalorder %s13, 0
    %p159 = por %p157, %p158
    %p160 = scmp.ne.s32.totalorder %s152, %s154
    %p161 = scmp.eq.s32.totalorder %s18, 1
    %p162 = por %p160, %p161
    %p163 = scmp.ne.s32.totalorder %s154, %s155
    %p164 = scmp.eq.s32.totalorder %s18, 0
    %p165 = por %p163, %p164
    %p166 = scmp.ne.s32.totalorder %s154, %s155
    %p167 = scmp.eq.s32.totalorder %s19, 1
    %p168 = por %p166, %p167
    %p170 = scmp.ne.s32.totalorder %s155, %s169
    %p171 = scmp.eq.s32.totalorder %s19, 0
    %p172 = por %p170, %p171
    %s173 = ssub.s32 %s13, %s20
    %p174 = scmp.eq.s32.totalorder %s173, 0
    %s176 = sadd.s32 %s175, 1
    %s177 = scalar_select %p174, %s175, %s176
    %p180 = pneg %p174
    %p181 = scmp.eq.s32.totalorder %s13, 1
    %p182 = por %p180, %p181
    %p183 = scmp.ne.s32.totalorder %s175, %s178
    %p184 = scmp.eq.s32.totalorder %s13, 0
    %p185 = por %p183, %p184
    %p186 = scmp.ne.s32.totalorder %s175, %s178
    %p187 = scmp.eq.s32.totalorder %s18, 1
    %p188 = por %p186, %p187
    %p189 = scmp.ne.s32.totalorder %s178, %s179
    %p190 = scmp.eq.s32.totalorder %s18, 0
    %p191 = por %p189, %p190
    %p192 = scmp.ne.s32.totalorder %s178, %s179
    %p193 = scmp.eq.s32.totalorder %s19, 1
    %p194 = por %p192, %p193
    %p196 = scmp.ne.s32.totalorder %s179, %s195
    %p197 = scmp.eq.s32.totalorder %s19, 0
    %p198 = por %p196, %p197
    %p199 = scmp.le.s32.totalorder 1, %s13
    %p200 = scmp.lt.s32.totalorder %s13, 3
    %p201 = pnand %p199, %p200
    %p202 = pneg %p201
    // Predicated region
    $region9: #{shuffle_v2_basic_unit.1} parent=5 // pred_check
      _
    $region10: #{shuffle_v2_basic_unit.1} parent=5 // pred_check_branch
      %204 = sbr.rel (%p201) target = $region12
    $region11: #{shuffle_v2_basic_unit.1} parent=5 // pred_region
      %s205 = ssub.s32 %s13, 1
      // Predicated region
      $region13: #{shuffle_v2_basic_unit.1} parent=11 // pred_check
        %p206 = pneg %p60
      $region14: #{shuffle_v2_basic_unit.1} parent=11 // pred_check_branch
        %208 = sbr.rel (%p206) target = $region16
      $region15: #{shuffle_v2_basic_unit.1} parent=11 // pred_region
        _
      $region16: #{shuffle_v2_basic_unit.1} parent=11 // pred_fallthru
        _
      // Predicated region
      $region17: #{shuffle_v2_basic_unit.1} parent=11 // pred_check
        %p209 = pneg %p81
      $region18: #{shuffle_v2_basic_unit.1} parent=11 // pred_check_branch
        %211 = sbr.rel (%p209) target = $region20
      $region19: #{shuffle_v2_basic_unit.1} parent=11 // pred_region
        _
      $region20: #{shuffle_v2_basic_unit.1} parent=11 // pred_fallthru
        _
      // Predicated region
      $region21: #{shuffle_v2_basic_unit.1} parent=11 // pred_check
        %p212 = pneg %p102
      $region22: #{shuffle_v2_basic_unit.1} parent=11 // pred_check_branch
        %214 = sbr.rel (%p212) target = $region24
      $region23: #{shuffle_v2_basic_unit.1} parent=11 // pred_region
        _
      $region24: #{shuffle_v2_basic_unit.1} parent=11 // pred_fallthru
        _
      // Predicated region
      $region25: #{shuffle_v2_basic_unit.1} parent=11 // pred_check
        %p215 = pneg %p123
      $region26: #{shuffle_v2_basic_unit.1} parent=11 // pred_check_branch
        %217 = sbr.rel (%p215) target = $region28
      $region27: #{shuffle_v2_basic_unit.1} parent=11 // pred_region
        _
      $region28: #{shuffle_v2_basic_unit.1} parent=11 // pred_fallthru
        _
      // Predicated region
      $region29: #{shuffle_v2_basic_unit.1} parent=11 // pred_check
        %p218 = pneg %p144
      $region30: #{shuffle_v2_basic_unit.1} parent=11 // pred_check_branch
        %220 = sbr.rel (%p218) target = $region32
      $region31: #{shuffle_v2_basic_unit.1} parent=11 // pred_region
        _
      $region32: #{shuffle_v2_basic_unit.1} parent=11 // pred_fallthru
        _
      // Predicated region
      $region33: #{shuffle_v2_basic_unit.1} parent=11 // pred_check
        %p221 = pneg %p165
      $region34: #{shuffle_v2_basic_unit.1} parent=11 // pred_check_branch
        %223 = sbr.rel (%p221) target = $region36
      $region35: #{shuffle_v2_basic_unit.1} parent=11 // pred_region
        _
      $region36: #{shuffle_v2_basic_unit.1} parent=11 // pred_fallthru
        _
    $region12: #{shuffle_v2_basic_unit.1} parent=5 // pred_fallthru
      _
    %p224 = scmp.lt.s32.totalorder %s13, 2
    // Predicated region
    $region37: #{shuffle_v2_basic_unit.1} parent=5 // pred_check
      %p225 = pneg %p224
    $region38: #{shuffle_v2_basic_unit.1} parent=5 // pred_check_branch
      %227 = sbr.rel (%p225) target = $region40
    $region39: #{shuffle_v2_basic_unit.1} parent=5 // pred_region
      // Predicated region
      $region41: #{shuffle_v2_basic_unit.1} parent=39 // pred_check
        %p228 = pneg %p33
      $region42: #{shuffle_v2_basic_unit.1} parent=39 // pred_check_branch
        %230 = sbr.rel (%p228) target = $region44
      $region43: #{shuffle_v2_basic_unit.1} parent=39 // pred_region
        %p231 = scmp.lt.s32.totalorder %s13, 1
        %s232 = scalar_select %p231, %s13, 1
        %s233 = smul.addr %s232, 4
        %s234 = smul.addr %s233, 4
        %s235 = scalar_lea.vmem %s0, %s234
      $region44: #{shuffle_v2_basic_unit.1} parent=39 // pred_fallthru
        _
    $region40: #{shuffle_v2_basic_unit.1} parent=5 // pred_fallthru
      _
    %p236 = scmp.le.s32.totalorder 1, %s13
    %p237 = scmp.lt.s32.totalorder %s13, 3
    %p238 = pnand %p236, %p237
    %p239 = pneg %p238
    // Predicated region
    $region45: #{shuffle_v2_basic_unit.1} parent=5 // pred_check
      _
    $region46: #{shuffle_v2_basic_unit.1} parent=5 // pred_check_branch
      %241 = sbr.rel (%p238) target = $region48
    $region47: #{shuffle_v2_basic_unit.1} parent=5 // pred_region
      %s242 = ssub.s32 %s13, 1
      %p243 = scmp.lt.s32.totalorder %s18, 1
      %s244 = scalar_select %p243, %s18, 1
      %s245 = smul.addr %s244, 4
      %s246 = smul.addr %s245, 4
      %s247 = scalar_lea.vmem %s0, %s246
      %p248 = pneg %p39
      %p249 = pneg %p36
      %p250 = pneg %p60
      %p251 = pneg %p57
      %p252 = pneg %p81
      %p253 = pneg %p78
      %p254 = pneg %p102
      %p255 = pneg %p99
      %p256 = pneg %p123
      %p257 = pneg %p120
      %p258 = pneg %p144
      %p259 = pneg %p141
      %p260 = pneg %p165
      %p261 = pneg %p162
      %p262 = pneg %p191
      %p263 = pneg %p188
      %p264 = scmp.lt.s32.totalorder %s18, 1
      %s265 = scalar_select %p264, %s18, 1
      %s266 = smul.addr %s265, 4
      %s267 = smul.addr %s266, 4
      %s268 = scalar_lea.vmem %s7, %s267
      %p269 = scmp.lt.s32.totalorder %s18, 1
      %s270 = scalar_select %p269, %s18, 1
      %s271 = smul.addr %s270, 4
      %s272 = smul.addr %s271, 4
      %s273 = scalar_lea.vmem %s0, %s272
      %p274 = scmp.lt.s32.totalorder %s18, 1
      %s275 = scalar_select %p274, %s18, 1
      %s276 = smul.addr %s275, 4
      %s277 = smul.addr %s276, 4
      %s278 = scalar_lea.vmem %s7, %s277
      %v280 = vld [vmem:[%s273] sm:$0xff]
      %281 = vst [vmem:[%s278] sm:$0xff] %v280
      %v282 = vld [vmem:[%s1] sm:$0x3]
      %s283 = scalar_lea.vmem %s273, 8
      %v284 = vld [vmem:[%s283] sm:$0xff]
      %286 = vst [vmem:[#allocation1] ss:$2 sm:$0xff] %v284
      %v287 = vld.sshfl [vmem:[#allocation1] sm:$0xff pattern:$0x75316420]
      %v288 = vld.sshfl [vmem:[#allocation1 + $0x8] sm:$0xff pattern:$0x75316420]
      %v291 = vpack.c.bf16 %v287, %v287
      %v292 = vpack.c.bf16 %v288, %v288
      %v293 = vld [vmem:[%s2] sm:$0xf]
      %295 = vset.pattern.permute.xlu0 0
      %296 = vperm.xlu0 %295, %v293
      %v297 = vpop.permute.xlu0 %296
      %vm299 = vcmask 31744
      %v301 = vsel %vm299, %v282, 0
      %vm303 = vcmask 1041408
      %v305 = vsel %vm303, %v291, 0
      %v308 = vsel %vm303, %v292, 0
      %310 = vmatpush.bf16.msra.mxu0 0
      %311 = vmatpush.bf16.msra.mxu0 0
      %312 = vmatpush.bf16.msra.mxu0 0
      %313 = vmatpush.bf16.msra.mxu0 0
      %314 = vmatpush.bf16.msra.mxu0 0
      %315 = vmatpush.bf16.msra.mxu0 0
      %316 = vmatpush.bf16.msra.mxu0 0
      %317 = vmatpush.bf16.msra.mxu0 %v305
      %318 = vmatmul.bf16.gmra.mxu0 %v301
      %v319 = vpop.f32.mrf.mxu0
      %v320 = vadd.f32 %v297, %v319
      %v321 = vpop.f32.mrf.mxu0
      %322 = vdwg.mxu0
      %323 = vmatpush.bf16.msra.mxu0 0
      %324 = vmatpush.bf16.msra.mxu0 0
      %325 = vmatpush.bf16.msra.mxu0 0
      %326 = vmatpush.bf16.msra.mxu0 0
      %327 = vmatpush.bf16.msra.mxu0 0
      %328 = vmatpush.bf16.msra.mxu0 0
      %329 = vmatpush.bf16.msra.mxu0 0
      %330 = vmatpush.bf16.msra.mxu0 %v308
      %331 = vmatmul.bf16.gmra.mxu0 %v301
      %v332 = vpop.f32.mrf.mxu0
      %v333 = vadd.f32 %v297, %v332
      %v334 = vpop.f32.mrf.mxu0
      %335 = vdwg.mxu0
      %v336 = vmax.f32 %v320, 0.0
      %v337 = vmax.f32 %v333, 0.0
      %vm338 = vcmask 273408
      %339 = vst.msk [vmem:[#allocation2] sm:$0xf] %vm338, 0.0
      %vm340 = vcmask 552208
      %341 = vst.msk [vmem:[#allocation2 + $0x8] sm:$0xf] %vm340, 0.0
      %v344 = vrot.slane %v337, 4
      %vm345 = vcmask 1043456
      %v346 = vsel %vm345, %v336, %v344
      %347 = vrot.lane.b32.xlu0 %v346, 34
      %v348 = vpop.permute.xlu0 %347
      %v349 = vrot.slane %v348, 4
      %vm350 = vcmask 277504
      %v351 = vsel %vm350, %v349, %v348
      %vm354 = vcmask 1043728
      %vm355 = vcmask 1047556
      %vm356 = vmor %vm355, %vm354
      %357 = vst.msk [vmem:[#allocation2] sm:$0xff] %vm356, %v351
      %358 = vst.msk [vmem:[#allocation2 + $0x8] sm:$0xf] %vm338, %v349
      %v359 = vlaneseq
      %v360 = vand.u32 %v359, 127
      %v361 = vadd.s32 %v360, 128
      %vm362 = vcmp.lt.s32.totalorder %v360, 0
      %v363 = vsub.s32 0, %v360
      %v364 = vsel %vm362, %v363, %v360
      %v365 = vshrl.u32 %v364, 4
      %v366 = vand.u32 %v364, 15
      %v367 = vsub.s32 0, %v366
      %v368 = vsel %vm362, %v367, %v366
      %vm369 = vcmp.lt.s32.totalorder %v361, 0
      %v370 = vsub.s32 0, %v361
      %v371 = vsel %vm369, %v370, %v361
      %v372 = vshrl.u32 %v371, 4
      %v373 = vand.u32 %v371, 15
      %v374 = vsub.s32 0, %v373
      %v375 = vsel %vm369, %v374, %v373
      %vm376 = vcmp.ne.s32.totalorder %v368, 0
      %vm377 = vcmp.ne.s32.totalorder %v375, 0
      %vm378 = vcmp.lt.s32.totalorder %v368, 0
      %vm379 = vcmp.lt.s32.totalorder %v375, 0
      %vm380 = vmand %vm378, %vm376
      %vm381 = vmand %vm379, %vm377
      %v382 = vadd.s32 %v368, 16
      %v383 = vadd.s32 %v375, 16
      %v384 = vsel %vm380, %v382, %v368
      %v385 = vsel %vm381, %v383, %v375
      %v386 = vld [vmem:[%s3] sm:$0xf]
      %v387 = vld [vmem:[#allocation2] sm:$0xff]
      %389 = vset.pattern.permute.xlu0 0
      %390 = vperm.xlu0 %389, %v386
      %v391 = vpop.permute.xlu0 %390
      %394 = vst [vmem:[#allocation1] ss:$2 sm:$0xff] %v387
      %v395 = vld.sshfl [vmem:[#allocation1] sm:$0xff pattern:$0x75316420]
      %v396 = vld.sshfl [vmem:[#allocation1 + $0x8] sm:$0xff pattern:$0x75316420]
      %v399 = vmul.f32 %v391, %v395
      %v400 = vmul.f32 %v391, %v396
      %v401 = vld [vmem:[#allocation2] sm:$0xff]
      %v402 = vld [vmem:[#allocation2 + $0x8] sm:$0xf]
      %403 = vset.pattern.permute.xlu0 1
      %404 = vperm.xlu0 %403, %v386
      %v405 = vpop.permute.xlu0 %404
      %409 = vst [vmem:[#allocation1] ss:$2 sm:$0xff] %v401
      %s410 = scalar_lea.vmem [#allocation1], 16
      %411 = vst [vmem:[%s410] ss:$2 sm:$0xff] %v402
      %v412 = vld.sshfl [vmem:[#allocation1] sm:$0xff pattern:$0x75316420]
      %v413 = vld.sshfl [vmem:[#allocation1 + $0x8] sm:$0xff pattern:$0x75316420]
      %v414 = vld.sshfl [vmem:[#allocation1 + $0x10] sm:$0xff pattern:$0x75316420]
      %415 = vrot.lane.b32.xlu0 %v412, 127
      %v416 = vpop.permute.xlu0 %415
      %417 = vrot.lane.b32.xlu0 %v413, 127
      %v418 = vpop.permute.xlu0 %417
      %419 = vrot.lane.b32.xlu0 %v414, 127
      %v420 = vpop.permute.xlu0 %419
      %vm421 = vcmask 1039360
      %v422 = vsel %vm421, %v416, %v418
      %v423 = vsel %vm421, %v418, %v420
      %v426 = vmul.f32 %v405, %v422
      %v427 = vmul.f32 %v405, %v423
      %v428 = vld [vmem:[#allocation2] sm:$0xff]
      %v429 = vld [vmem:[#allocation2 + $0x8] sm:$0xf]
      %430 = vset.pattern.permute.xlu0 2
      %431 = vperm.xlu0 %430, %v386
      %v432 = vpop.permute.xlu0 %431
      %436 = vst [vmem:[#allocation1] ss:$2 sm:$0xff] %v428
      %s437 = scalar_lea.vmem [#allocation1], 16
      %438 = vst [vmem:[%s437] ss:$2 sm:$0xff] %v429
      %v439 = vld.sshfl [vmem:[#allocation1] sm:$0xff pattern:$0x75316420]
      %v440 = vld.sshfl [vmem:[#allocation1 + $0x8] sm:$0xff pattern:$0x75316420]
      %v441 = vld.sshfl [vmem:[#allocation1 + $0x10] sm:$0xff pattern:$0x75316420]
      %442 = vrot.lane.b32.xlu0 %v439, 126
      %v443 = vpop.permute.xlu0 %442
      %444 = vrot.lane.b32.xlu0 %v440, 126
      %v445 = vpop.permute.xlu0 %444
      %446 = vrot.lane.b32.xlu0 %v441, 126
      %v447 = vpop.permute.xlu0 %446
      %vm448 = vcmask 1031168
      %v449 = vsel %vm448, %v443, %v445
      %v450 = vsel %vm448, %v445, %v447
      %v453 = vmul.f32 %v432, %v449
      %v454 = vmul.f32 %v432, %v450
      %v455 = vld [vmem:[#allocation2] sm:$0xff]
      %v456 = vld [vmem:[#allocation2 + $0x8] sm:$0xf]
      %457 = vset.pattern.permute.xlu0 3
      %458 = vperm.xlu0 %457, %v386
      %v459 = vpop.permute.xlu0 %458
      %463 = vst [vmem:[#allocation1] ss:$2 sm:$0xff] %v455
      %s464 = scalar_lea.vmem [#allocation1], 16
      %465 = vst [vmem:[%s464] ss:$2 sm:$0xff] %v456
      %v466 = vld.sshfl [vmem:[#allocation1] sm:$0xff pattern:$0x75316420]
      %v467 = vld.sshfl [vmem:[#allocation1 + $0x8] sm:$0xff pattern:$0x75316420]
      %v468 = vld.sshfl [vmem:[#allocation1 + $0x10] sm:$0xff pattern:$0x75316420]
      %469 = vrot.lane.b32.xlu0 %v466, 125
      %v470 = vpop.permute.xlu0 %469
      %471 = vrot.lane.b32.xlu0 %v467, 125
      %v472 = vpop.permute.xlu0 %471
      %473 = vrot.lane.b32.xlu0 %v468, 125
      %v474 = vpop.permute.xlu0 %473
      %vm475 = vcmask 1022976
      %v476 = vsel %vm475, %v470, %v472
      %v477 = vsel %vm475, %v472, %v474
      %v480 = vmul.f32 %v459, %v476
      %v481 = vmul.f32 %v459, %v477
      %v482 = vld [vmem:[#allocation2] sm:$0xff]
      %v483 = vld [vmem:[#allocation2 + $0x8] sm:$0xf]
      %484 = vset.pattern.permute.xlu0 4
      %485 = vperm.xlu0 %484, %v386
      %v486 = vpop.permute.xlu0 %485
      %490 = vst [vmem:[#allocation1] ss:$2 sm:$0xff] %v482
      %s491 = scalar_lea.vmem [#allocation1], 16
      %492 = vst [vmem:[%s491] ss:$2 sm:$0xff] %v483
      %v493 = vld.sshfl [vmem:[#allocation1] sm:$0xff pattern:$0x75316420]
      %v494 = vld.sshfl [vmem:[#allocation1 + $0x8] sm:$0xff pattern:$0x75316420]
      %v495 = vld.sshfl [vmem:[#allocation1 + $0x10] sm:$0xff pattern:$0x75316420]
      %496 = vrot.lane.b32.xlu0 %v493, 124
      %v497 = vpop.permute.xlu0 %496
      %498 = vrot.lane.b32.xlu0 %v494, 124
      %v499 = vpop.permute.xlu0 %498
      %500 = vrot.lane.b32.xlu0 %v495, 124
      %v501 = vpop.permute.xlu0 %500
      %vm502 = vcmask 1014784
      %v503 = vsel %vm502, %v497, %v499
      %v504 = vsel %vm502, %v499, %v501
      %v507 = vmul.f32 %v486, %v503
      %v508 = vmul.f32 %v486, %v504
      %v509 = vld [vmem:[#allocation2] sm:$0xff]
      %v510 = vld [vmem:[#allocation2 + $0x8] sm:$0xf]
      %511 = vset.pattern.permute.xlu0 5
      %512 = vperm.xlu0 %511, %v386
      %v513 = vpop.permute.xlu0 %512
      %517 = vst [vmem:[#allocation1] ss:$2 sm:$0xff] %v509
      %s518 = scalar_lea.vmem [#allocation1], 16
      %519 = vst [vmem:[%s518] ss:$2 sm:$0xff] %v510
      %v520 = vld.sshfl [vmem:[#allocation1] sm:$0xff pattern:$0x75316420]
      %v521 = vld.sshfl [vmem:[#allocation1 + $0x8] sm:$0xff pattern:$0x75316420]
      %v522 = vld.sshfl [vmem:[#allocation1 + $0x10] sm:$0xff pattern:$0x75316420]
      %523 = vrot.lane.b32.xlu0 %v520, 112
      %v524 = vpop.permute.xlu0 %523
      %525 = vrot.lane.b32.xlu0 %v521, 112
      %v526 = vpop.permute.xlu0 %525
      %527 = vrot.lane.b32.xlu0 %v522, 112
      %v528 = vpop.permute.xlu0 %527
      %vm529 = vcmask 916480
      %v530 = vsel %vm529, %v524, %v526
      %v531 = vsel %vm529, %v526, %v528
      %v534 = vmul.f32 %v513, %v530
      %v535 = vmul.f32 %v513, %v531
      %v536 = vadd.f32 %v399, %v534
      %v537 = vadd.f32 %v400, %v535
      %v538 = vld [vmem:[#allocation2] sm:$0xff]
      %v539 = vld [vmem:[#allocation2 + $0x8] sm:$0xf]
      %540 = vset.pattern.permute.xlu0 6
      %541 = vperm.xlu0 %540, %v386
      %v542 = vpop.permute.xlu0 %541
      %546 = vst [vmem:[#allocation1] ss:$2 sm:$0xff] %v538
      %s547 = scalar_lea.vmem [#allocation1], 16
      %548 = vst [vmem:[%s547] ss:$2 sm:$0xff] %v539
      %v549 = vld.sshfl [vmem:[#allocation1] sm:$0xff pattern:$0x75316420]
      %v550 = vld.sshfl [vmem:[#allocation1 + $0x8] sm:$0xff pattern:$0x75316420]
      %v551 = vld.sshfl [vmem:[#allocation1 + $0x10] sm:$0xff pattern:$0x75316420]
      %552 = vrot.lane.b32.xlu0 %v549, 111
      %v553 = vpop.permute.xlu0 %552
      %554 = vrot.lane.b32.xlu0 %v550, 111
      %v555 = vpop.permute.xlu0 %554
      %556 = vrot.lane.b32.xlu0 %v551, 111
      %v557 = vpop.permute.xlu0 %556
      %vm558 = vcmask 908288
      %v559 = vsel %vm558, %v553, %v555
      %v560 = vsel %vm558, %v555, %v557
      %v563 = vmul.f32 %v542, %v559
      %v564 = vmul.f32 %v542, %v560
      %v565 = vadd.f32 %v426, %v563
      %v566 = vadd.f32 %v427, %v564
      %v567 = vld [vmem:[#allocation2] sm:$0xff]
      %v568 = vld [vmem:[#allocation2 + $0x8] sm:$0xf]
      %569 = vset.pattern.permute.xlu0 7
      %570 = vperm.xlu0 %569, %v386
      %v571 = vpop.permute.xlu0 %570
      %575 = vst [vmem:[#allocation1] ss:$2 sm:$0xff] %v567
      %s576 = scalar_lea.vmem [#allocation1], 16
      %577 = vst [vmem:[%s576] ss:$2 sm:$0xff] %v568
      %v578 = vld.sshfl [vmem:[#allocation1] sm:$0xff pattern:$0x75316420]
      %v579 = vld.sshfl [vmem:[#allocation1 + $0x8] sm:$0xff pattern:$0x75316420]
      %v580 = vld.sshfl [vmem:[#allocation1 + $0x10] sm:$0xff pattern:$0x75316420]
      %581 = vrot.lane.b32.xlu0 %v578, 110
      %v582 = vpop.permute.xlu0 %581
      %583 = vrot.lane.b32.xlu0 %v579, 110
      %v584 = vpop.permute.xlu0 %583
      %585 = vrot.lane.b32.xlu0 %v580, 110
      %v586 = vpop.permute.xlu0 %585
      %vm587 = vcmask 900096
      %v588 = vsel %vm587, %v582, %v584
      %v589 = vsel %vm587, %v584, %v586
      %v592 = vmul.f32 %v571, %v588
      %v593 = vmul.f32 %v571, %v589
      %v594 = vadd.f32 %v453, %v592
      %v595 = vadd.f32 %v454, %v593
      %v596 = vld [vmem:[#allocation2] sm:$0xff]
      %v597 = vld [vmem:[#allocation2 + $0x8] sm:$0xf]
      %598 = vset.pattern.permute.xlu0 8
      %599 = vperm.xlu0 %598, %v386
      %v600 = vpop.permute.xlu0 %599
      %604 = vst [vmem:[#allocation1] ss:$2 sm:$0xff] %v596
      %s605 = scalar_lea.vmem [#allocation1], 16
      %606 = vst [vmem:[%s605] ss:$2 sm:$0xff] %v597
      %v607 = vld.sshfl [vmem:[#allocation1] sm:$0xff pattern:$0x75316420]
      %v608 = vld.sshfl [vmem:[#allocation1 + $0x8] sm:$0xff pattern:$0x75316420]
      %v609 = vld.sshfl [vmem:[#allocation1 + $0x10] sm:$0xff pattern:$0x75316420]
      %610 = vrot.lane.b32.xlu0 %v607, 109
      %v611 = vpop.permute.xlu0 %610
      %612 = vrot.lane.b32.xlu0 %v608, 109
      %v613 = vpop.permute.xlu0 %612
      %614 = vrot.lane.b32.xlu0 %v609, 109
      %v615 = vpop.permute.xlu0 %614
      %vm616 = vcmask 891904
      %v617 = vsel %vm616, %v611, %v613
      %v618 = vsel %vm616, %v613, %v615
      %v621 = vmul.f32 %v600, %v617
      %v622 = vmul.f32 %v600, %v618
      %v623 = vadd.f32 %v480, %v621
      %v624 = vadd.f32 %v481, %v622
      %v625 = vld [vmem:[#allocation2] sm:$0xff]
      %v626 = vld [vmem:[#allocation2 + $0x8] sm:$0xf]
      %627 = vset.pattern.permute.xlu0 9
      %628 = vperm.xlu0 %627, %v386
      %v629 = vpop.permute.xlu0 %628
      %633 = vst [vmem:[#allocation1] ss:$2 sm:$0xff] %v625
      %s634 = scalar_lea.vmem [#allocation1], 16
      %635 = vst [vmem:[%s634] ss:$2 sm:$0xff] %v626
      %v636 = vld.sshfl [vmem:[#allocation1] sm:$0xff pattern:$0x75316420]
      %v637 = vld.sshfl [vmem:[#allocation1 + $0x8] sm:$0xff pattern:$0x75316420]
      %v638 = vld.sshfl [vmem:[#allocation1 + $0x10] sm:$0xff pattern:$0x75316420]
      %639 = vrot.lane.b32.xlu0 %v636, 108
      %v640 = vpop.permute.xlu0 %639
      %641 = vrot.lane.b32.xlu0 %v637, 108
      %v642 = vpop.permute.xlu0 %641
      %643 = vrot.lane.b32.xlu0 %v638, 108
      %v644 = vpop.permute.xlu0 %643
      %vm645 = vcmask 883712
      %v646 = vsel %vm645, %v640, %v642
      %v647 = vsel %vm645, %v642, %v644
      %v650 = vmul.f32 %v629, %v646
      %v651 = vmul.f32 %v629, %v647
      %v652 = vadd.f32 %v507, %v650
      %v653 = vadd.f32 %v508, %v651
      %v654 = vld [vmem:[#allocation2] sm:$0xff]
      %v655 = vld [vmem:[#allocation2 + $0x8] sm:$0xf]
      %656 = vset.pattern.permute.xlu0 10
      %657 = vperm.xlu0 %656, %v386
      %v658 = vpop.permute.xlu0 %657
      %662 = vst [vmem:[#allocation1] ss:$2 sm:$0xff] %v654
      %s663 = scalar_lea.vmem [#allocation1], 16
      %664 = vst [vmem:[%s663] ss:$2 sm:$0xff] %v655
      %v665 = vld.sshfl [vmem:[#allocation1] sm:$0xff pattern:$0x75316420]
      %v666 = vld.sshfl [vmem:[#allocation1 + $0x8] sm:$0xff pattern:$0x75316420]
      %v667 = vld.sshfl [vmem:[#allocation1 + $0x10] sm:$0xff pattern:$0x75316420]
      %668 = vrot.lane.b32.xlu0 %v665, 96
      %v669 = vpop.permute.xlu0 %668
      %670 = vrot.lane.b32.xlu0 %v666, 96
      %v671 = vpop.permute.xlu0 %670
      %672 = vrot.lane.b32.xlu0 %v667, 96
      %v673 = vpop.permute.xlu0 %672
      %vm674 = vcmask 785408
      %v675 = vsel %vm674, %v669, %v671
      %v676 = vsel %vm674, %v671, %v673
      %v679 = vmul.f32 %v658, %v675
      %v680 = vmul.f32 %v658, %v676
      %v681 = vadd.f32 %v536, %v679
      %v682 = vadd.f32 %v537, %v680
      %v683 = vld [vmem:[#allocation2] sm:$0xff]
      %v684 = vld [vmem:[#allocation2 + $0x8] sm:$0xf]
      %685 = vset.pattern.permute.xlu0 11
      %686 = vperm.xlu0 %685, %v386
      %v687 = vpop.permute.xlu0 %686
      %691 = vst [vmem:[#allocation1] ss:$2 sm:$0xff] %v683
      %s692 = scalar_lea.vmem [#allocation1], 16
      %693 = vst [vmem:[%s692] ss:$2 sm:$0xff] %v684
      %v694 = vld.sshfl [vmem:[#allocation1] sm:$0xff pattern:$0x75316420]
      %v695 = vld.sshfl [vmem:[#allocation1 + $0x8] sm:$0xff pattern:$0x75316420]
      %v696 = vld.sshfl [vmem:[#allocation1 + $0x10] sm:$0xff pattern:$0x75316420]
      %697 = vrot.lane.b32.xlu0 %v694, 95
      %v698 = vpop.permute.xlu0 %697
      %699 = vrot.lane.b32.xlu0 %v695, 95
      %v700 = vpop.permute.xlu0 %699
      %701 = vrot.lane.b32.xlu0 %v696, 95
      %v702 = vpop.permute.xlu0 %701
      %vm703 = vcmask 777216
      %v704 = vsel %vm703, %v698, %v700
      %v705 = vsel %vm703, %v700, %v702
      %v708 = vmul.f32 %v687, %v704
      %v709 = vmul.f32 %v687, %v705
      %v710 = vadd.f32 %v565, %v708
      %v711 = vadd.f32 %v566, %v709
      %v712 = vld [vmem:[#allocation2] sm:$0xff]
      %v713 = vld [vmem:[#allocation2 + $0x8] sm:$0xf]
      %714 = vset.pattern.permute.xlu0 12
      %715 = vperm.xlu0 %714, %v386
      %v716 = vpop.permute.xlu0 %715
      %720 = vst [vmem:[#allocation1] ss:$2 sm:$0xff] %v712
      %s721 = scalar_lea.vmem [#allocation1], 16
      %722 = vst [vmem:[%s721] ss:$2 sm:$0xff] %v713
      %v723 = vld.sshfl [vmem:[#allocation1] sm:$0xff pattern:$0x75316420]
      %v724 = vld.sshfl [vmem:[#allocation1 + $0x8] sm:$0xff pattern:$0x75316420]
      %v725 = vld.sshfl [vmem:[#allocation1 + $0x10] sm:$0xff pattern:$0x75316420]
      %726 = vrot.lane.b32.xlu0 %v723, 94
      %v727 = vpop.permute.xlu0 %726
      %728 = vrot.lane.b32.xlu0 %v724, 94
      %v729 = vpop.permute.xlu0 %728
      %730 = vrot.lane.b32.xlu0 %v725, 94
      %v731 = vpop.permute.xlu0 %730
      %vm732 = vcmask 769024
      %v733 = vsel %vm732, %v727, %v729
      %v734 = vsel %vm732, %v729, %v731
      %v737 = vmul.f32 %v716, %v733
      %v738 = vmul.f32 %v716, %v734
      %v739 = vadd.f32 %v594, %v737
      %v740 = vadd.f32 %v595, %v738
      %v741 = vld [vmem:[#allocation2] sm:$0xff]
      %v742 = vld [vmem:[#allocation2 + $0x8] sm:$0xf]
      %743 = vset.pattern.permute.xlu0 13
      %744 = vperm.xlu0 %743, %v386
      %v745 = vpop.permute.xlu0 %744
      %749 = vst [vmem:[#allocation1] ss:$2 sm:$0xff] %v741
      %s750 = scalar_lea.vmem [#allocation1], 16
      %751 = vst [vmem:[%s750] ss:$2 sm:$0xff] %v742
      %v752 = vld.sshfl [vmem:[#allocation1] sm:$0xff pattern:$0x75316420]
      %v753 = vld.sshfl [vmem:[#allocation1 + $0x8] sm:$0xff pattern:$0x75316420]
      %v754 = vld.sshfl [vmem:[#allocation1 + $0x10] sm:$0xff pattern:$0x75316420]
      %755 = vrot.lane.b32.xlu0 %v752, 93
      %v756 = vpop.permute.xlu0 %755
      %757 = vrot.lane.b32.xlu0 %v753, 93
      %v758 = vpop.permute.xlu0 %757
      %759 = vrot.lane.b32.xlu0 %v754, 93
      %v760 = vpop.permute.xlu0 %759
      %vm761 = vcmask 760832
      %v762 = vsel %vm761, %v756, %v758
      %v763 = vsel %vm761, %v758, %v760
      %v766 = vmul.f32 %v745, %v762
      %v767 = vmul.f32 %v745, %v763
      %v768 = vadd.f32 %v623, %v766
      %v769 = vadd.f32 %v624, %v767
      %v770 = vld [vmem:[#allocation2] sm:$0xff]
      %v771 = vld [vmem:[#allocation2 + $0x8] sm:$0xf]
      %772 = vset.pattern.permute.xlu0 14
      %773 = vperm.xlu0 %772, %v386
      %v774 = vpop.permute.xlu0 %773
      %778 = vst [vmem:[#allocation1] ss:$2 sm:$0xff] %v770
      %s779 = scalar_lea.vmem [#allocation1], 16
      %780 = vst [vmem:[%s779] ss:$2 sm:$0xff] %v771
      %v781 = vld.sshfl [vmem:[#allocation1] sm:$0xff pattern:$0x75316420]
      %v782 = vld.sshfl [vmem:[#allocation1 + $0x8] sm:$0xff pattern:$0x75316420]
      %v783 = vld.sshfl [vmem:[#allocation1 + $0x10] sm:$0xff pattern:$0x75316420]
      %784 = vrot.lane.b32.xlu0 %v781, 92
      %v785 = vpop.permute.xlu0 %784
      %786 = vrot.lane.b32.xlu0 %v782, 92
      %v787 = vpop.permute.xlu0 %786
      %788 = vrot.lane.b32.xlu0 %v783, 92
      %v789 = vpop.permute.xlu0 %788
      %vm790 = vcmask 752640
      %v791 = vsel %vm790, %v785, %v787
      %v792 = vsel %vm790, %v787, %v789
      %v795 = vmul.f32 %v774, %v791
      %v796 = vmul.f32 %v774, %v792
      %v797 = vadd.f32 %v652, %v795
      %v798 = vadd.f32 %v653, %v796
      %v799 = vld [vmem:[#allocation2] sm:$0xff]
      %v800 = vld [vmem:[#allocation2 + $0x8] sm:$0xf]
      %801 = vset.pattern.permute.xlu0 15
      %802 = vperm.xlu0 %801, %v386
      %v803 = vpop.permute.xlu0 %802
      %807 = vst [vmem:[#allocation1] ss:$2 sm:$0xff] %v799
      %s808 = scalar_lea.vmem [#allocation1], 16
      %809 = vst [vmem:[%s808] ss:$2 sm:$0xff] %v800
      %v810 = vld.sshfl [vmem:[#allocation1] sm:$0xff pattern:$0x75316420]
      %v811 = vld.sshfl [vmem:[#allocation1 + $0x8] sm:$0xff pattern:$0x75316420]
      %v812 = vld.sshfl [vmem:[#allocation1 + $0x10] sm:$0xff pattern:$0x75316420]
      %813 = vrot.lane.b32.xlu0 %v810, 80
      %v814 = vpop.permute.xlu0 %813
      %815 = vrot.lane.b32.xlu0 %v811, 80
      %v816 = vpop.permute.xlu0 %815
      %817 = vrot.lane.b32.xlu0 %v812, 80
      %v818 = vpop.permute.xlu0 %817
      %vm819 = vcmask 654336
      %v820 = vsel %vm819, %v814, %v816
      %v821 = vsel %vm819, %v816, %v818
      %v824 = vmul.f32 %v803, %v820
      %v825 = vmul.f32 %v803, %v821
      %v826 = vadd.f32 %v681, %v824
      %v827 = vadd.f32 %v682, %v825
      %v828 = vld [vmem:[#allocation2] sm:$0xff]
      %v829 = vld [vmem:[#allocation2 + $0x8] sm:$0xf]
      %830 = vset.pattern.permute.xlu0 16
      %831 = vperm.xlu0 %830, %v386
      %v832 = vpop.permute.xlu0 %831
      %836 = vst [vmem:[#allocation1] ss:$2 sm:$0xff] %v828
      %s837 = scalar_lea.vmem [#allocation1], 16
      %838 = vst [vmem:[%s837] ss:$2 sm:$0xff] %v829
      %v839 = vld.sshfl [vmem:[#allocation1] sm:$0xff pattern:$0x75316420]
      %v840 = vld.sshfl [vmem:[#allocation1 + $0x8] sm:$0xff pattern:$0x75316420]
      %v841 = vld.sshfl [vmem:[#allocation1 + $0x10] sm:$0xff pattern:$0x75316420]
      %842 = vrot.lane.b32.xlu0 %v839, 79
      %v843 = vpop.permute.xlu0 %842
      %844 = vrot.lane.b32.xlu0 %v840, 79
      %v845 = vpop.permute.xlu0 %844
      %846 = vrot.lane.b32.xlu0 %v841, 79
      %v847 = vpop.permute.xlu0 %846
      %vm848 = vcmask 646144
      %v849 = vsel %vm848, %v843, %v845
      %v850 = vsel %vm848, %v845, %v847
      %v853 = vmul.f32 %v832, %v849
      %v854 = vmul.f32 %v832, %v850
      %v855 = vadd.f32 %v710, %v853
      %v856 = vadd.f32 %v711, %v854
      %v857 = vld [vmem:[#allocation2] sm:$0xff]
      %v858 = vld [vmem:[#allocation2 + $0x8] sm:$0xf]
      %859 = vset.pattern.permute.xlu0 17
      %860 = vperm.xlu0 %859, %v386
      %v861 = vpop.permute.xlu0 %860
      %865 = vst [vmem:[#allocation1] ss:$2 sm:$0xff] %v857
      %s866 = scalar_lea.vmem [#allocation1], 16
      %867 = vst [vmem:[%s866] ss:$2 sm:$0xff] %v858
      %v868 = vld.sshfl [vmem:[#allocation1] sm:$0xff pattern:$0x75316420]
      %v869 = vld.sshfl [vmem:[#allocation1 + $0x8] sm:$0xff pattern:$0x75316420]
      %v870 = vld.sshfl [vmem:[#allocation1 + $0x10] sm:$0xff pattern:$0x75316420]
      %871 = vrot.lane.b32.xlu0 %v868, 78
      %v872 = vpop.permute.xlu0 %871
      %873 = vrot.lane.b32.xlu0 %v869, 78
      %v874 = vpop.permute.xlu0 %873
      %875 = vrot.lane.b32.xlu0 %v870, 78
      %v876 = vpop.permute.xlu0 %875
      %vm877 = vcmask 637952
      %v878 = vsel %vm877, %v872, %v874
      %v879 = vsel %vm877, %v874, %v876
      %v882 = vmul.f32 %v861, %v878
      %v883 = vmul.f32 %v861, %v879
      %v884 = vadd.f32 %v739, %v882
      %v885 = vadd.f32 %v740, %v883
      %v886 = vld [vmem:[#allocation2] sm:$0xff]
      %v887 = vld [vmem:[#allocation2 + $0x8] sm:$0xf]
      %888 = vset.pattern.permute.xlu0 18
      %889 = vperm.xlu0 %888, %v386
      %v890 = vpop.permute.xlu0 %889
      %894 = vst [vmem:[#allocation1] ss:$2 sm:$0xff] %v886
      %s895 = scalar_lea.vmem [#allocation1], 16
      %896 = vst [vmem:[%s895] ss:$2 sm:$0xff] %v887
      %v897 = vld.sshfl [vmem:[#allocation1] sm:$0xff pattern:$0x75316420]
      %v898 = vld.sshfl [vmem:[#allocation1 + $0x8] sm:$0xff pattern:$0x75316420]
      %v899 = vld.sshfl [vmem:[#allocation1 + $0x10] sm:$0xff pattern:$0x75316420]
      %900 = vrot.lane.b32.xlu0 %v897, 77
      %v901 = vpop.permute.xlu0 %900
      %902 = vrot.lane.b32.xlu0 %v898, 77
      %v903 = vpop.permute.xlu0 %902
      %904 = vrot.lane.b32.xlu0 %v899, 77
      %v905 = vpop.permute.xlu0 %904
      %vm906 = vcmask 629760
      %v907 = vsel %vm906, %v901, %v903
      %v908 = vsel %vm906, %v903, %v905
      %v911 = vmul.f32 %v890, %v907
      %v912 = vmul.f32 %v890, %v908
      %v913 = vadd.f32 %v768, %v911
      %v914 = vadd.f32 %v769, %v912
      %v915 = vld [vmem:[#allocation2] sm:$0xff]
      %v916 = vld [vmem:[#allocation2 + $0x8] sm:$0xf]
      %917 = vset.pattern.permute.xlu0 19
      %918 = vperm.xlu0 %917, %v386
      %v919 = vpop.permute.xlu0 %918
      %923 = vst [vmem:[#allocation1] ss:$2 sm:$0xff] %v915
      %s924 = scalar_lea.vmem [#allocation1], 16
      %925 = vst [vmem:[%s924] ss:$2 sm:$0xff] %v916
      %v926 = vld.sshfl [vmem:[#allocation1] sm:$0xff pattern:$0x75316420]
      %v927 = vld.sshfl [vmem:[#allocation1 + $0x8] sm:$0xff pattern:$0x75316420]
      %v928 = vld.sshfl [vmem:[#allocation1 + $0x10] sm:$0xff pattern:$0x75316420]
      %929 = vrot.lane.b32.xlu0 %v926, 76
      %v930 = vpop.permute.xlu0 %929
      %931 = vrot.lane.b32.xlu0 %v927, 76
      %v932 = vpop.permute.xlu0 %931
      %933 = vrot.lane.b32.xlu0 %v928, 76
      %v934 = vpop.permute.xlu0 %933
      %vm935 = vcmask 621568
      %v936 = vsel %vm935, %v930, %v932
      %v937 = vsel %vm935, %v932, %v934
      %v940 = vmul.f32 %v919, %v936
      %v941 = vmul.f32 %v919, %v937
      %v942 = vadd.f32 %v797, %v940
      %v943 = vadd.f32 %v798, %v941
      %v944 = vld [vmem:[#allocation2] sm:$0xff]
      %v945 = vld [vmem:[#allocation2 + $0x8] sm:$0xf]
      %946 = vset.pattern.permute.xlu0 20
      %947 = vperm.xlu0 %946, %v386
      %v948 = vpop.permute.xlu0 %947
      %952 = vst [vmem:[#allocation1] ss:$2 sm:$0xff] %v944
      %s953 = scalar_lea.vmem [#allocation1], 16
      %954 = vst [vmem:[%s953] ss:$2 sm:$0xff] %v945
      %v955 = vld.sshfl [vmem:[#allocation1] sm:$0xff pattern:$0x75316420]
      %v956 = vld.sshfl [vmem:[#allocation1 + $0x8] sm:$0xff pattern:$0x75316420]
      %v957 = vld.sshfl [vmem:[#allocation1 + $0x10] sm:$0xff pattern:$0x75316420]
      %958 = vrot.lane.b32.xlu0 %v955, 64
      %v959 = vpop.permute.xlu0 %958
      %960 = vrot.lane.b32.xlu0 %v956, 64
      %v961 = vpop.permute.xlu0 %960
      %962 = vrot.lane.b32.xlu0 %v957, 64
      %v963 = vpop.permute.xlu0 %962
      %vm964 = vcmask 523264
      %v965 = vsel %vm964, %v959, %v961
      %v966 = vsel %vm964, %v961, %v963
      %v969 = vmul.f32 %v948, %v965
      %v970 = vmul.f32 %v948, %v966
      %v971 = vadd.f32 %v826, %v969
      %v972 = vadd.f32 %v827, %v970
      %v973 = vld [vmem:[#allocation2] sm:$0xff]
      %v974 = vld [vmem:[#allocation2 + $0x8] sm:$0xf]
      %975 = vset.pattern.permute.xlu0 21
      %976 = vperm.xlu0 %975, %v386
      %v977 = vpop.permute.xlu0 %976
      %981 = vst [vmem:[#allocation1] ss:$2 sm:$0xff] %v973
      %s982 = scalar_lea.vmem [#allocation1], 16
      %983 = vst [vmem:[%s982] ss:$2 sm:$0xff] %v974
      %v984 = vld.sshfl [vmem:[#allocation1] sm:$0xff pattern:$0x75316420]
      %v985 = vld.sshfl [vmem:[#allocation1 + $0x8] sm:$0xff pattern:$0x75316420]
      %v986 = vld.sshfl [vmem:[#allocation1 + $0x10] sm:$0xff pattern:$0x75316420]
      %987 = vrot.lane.b32.xlu0 %v984, 63
      %v988 = vpop.permute.xlu0 %987
      %989 = vrot.lane.b32.xlu0 %v985, 63
      %v990 = vpop.permute.xlu0 %989
      %991 = vrot.lane.b32.xlu0 %v986, 63
      %v992 = vpop.permute.xlu0 %991
      %vm993 = vcmask 515072
      %v994 = vsel %vm993, %v988, %v990
      %v995 = vsel %vm993, %v990, %v992
      %v998 = vmul.f32 %v977, %v994
      %v999 = vmul.f32 %v977, %v995
      %v1000 = vadd.f32 %v855, %v998
      %v1001 = vadd.f32 %v856, %v999
      %v1002 = vld [vmem:[#allocation2] sm:$0xff]
      %v1003 = vld [vmem:[#allocation2 + $0x8] sm:$0xf]
      %1004 = vset.pattern.permute.xlu0 22
      %1005 = vperm.xlu0 %1004, %v386
      %v1006 = vpop.permute.xlu0 %1005
      %1010 = vst [vmem:[#allocation1] ss:$2 sm:$0xff] %v1002
      %s1011 = scalar_lea.vmem [#allocation1], 16
      %1012 = vst [vmem:[%s1011] ss:$2 sm:$0xff] %v1003
      %v1013 = vld.sshfl [vmem:[#allocation1] sm:$0xff pattern:$0x75316420]
      %v1014 = vld.sshfl [vmem:[#allocation1 + $0x8] sm:$0xff pattern:$0x75316420]
      %v1015 = vld.sshfl [vmem:[#allocation1 + $0x10] sm:$0xff pattern:$0x75316420]
      %1016 = vrot.lane.b32.xlu0 %v1013, 62
      %v1017 = vpop.permute.xlu0 %1016
      %1018 = vrot.lane.b32.xlu0 %v1014, 62
      %v1019 = vpop.permute.xlu0 %1018
      %1020 = vrot.lane.b32.xlu0 %v1015, 62
      %v1021 = vpop.permute.xlu0 %1020
      %vm1022 = vcmask 506880
      %v1023 = vsel %vm1022, %v1017, %v1019
      %v1024 = vsel %vm1022, %v1019, %v1021
      %v1027 = vmul.f32 %v1006, %v1023
      %v1028 = vmul.f32 %v1006, %v1024
      %v1029 = vadd.f32 %v884, %v1027
      %v1030 = vadd.f32 %v885, %v1028
      %v1031 = vld [vmem:[#allocation2] sm:$0xff]
      %v1032 = vld [vmem:[#allocation2 + $0x8] sm:$0xf]
      %1033 = vset.pattern.permute.xlu0 23
      %1034 = vperm.xlu0 %1033, %v386
      %v1035 = vpop.permute.xlu0 %1034
      %1039 = vst [vmem:[#allocation1] ss:$2 sm:$0xff] %v1031
      %s1040 = scalar_lea.vmem [#allocation1], 16
      %1041 = vst [vmem:[%s1040] ss:$2 sm:$0xff] %v1032
      %v1042 = vld.sshfl [vmem:[#allocation1] sm:$0xff pattern:$0x75316420]
      %v1043 = vld.sshfl [vmem:[#allocation1 + $0x8] sm:$0xff pattern:$0x75316420]
      %v1044 = vld.sshfl [vmem:[#allocation1 + $0x10] sm:$0xff pattern:$0x75316420]
      %1045 = vrot.lane.b32.xlu0 %v1042, 61
      %v1046 = vpop.permute.xlu0 %1045
      %1047 = vrot.lane.b32.xlu0 %v1043, 61
      %v1048 = vpop.permute.xlu0 %1047
      %1049 = vrot.lane.b32.xlu0 %v1044, 61
      %v1050 = vpop.permute.xlu0 %1049
      %vm1051 = vcmask 498688
      %v1052 = vsel %vm1051, %v1046, %v1048
      %v1053 = vsel %vm1051, %v1048, %v1050
      %v1056 = vmul.f32 %v1035, %v1052
      %v1057 = vmul.f32 %v1035, %v1053
      %v1058 = vadd.f32 %v913, %v1056
      %v1059 = vadd.f32 %v914, %v1057
      %v1060 = vld [vmem:[#allocation2] sm:$0xff]
      %v1061 = vld [vmem:[#allocation2 + $0x8] sm:$0xf]
      %1062 = vset.pattern.permute.xlu0 24
      %1063 = vperm.xlu0 %1062, %v386
      %v1064 = vpop.permute.xlu0 %1063
      %1068 = vst [vmem:[#allocation1] ss:$2 sm:$0xff] %v1060
      %s1069 = scalar_lea.vmem [#allocation1], 16
      %1070 = vst [vmem:[%s1069] ss:$2 sm:$0xff] %v1061
      %v1071 = vld.sshfl [vmem:[#allocation1] sm:$0xff pattern:$0x75316420]
      %v1072 = vld.sshfl [vmem:[#allocation1 + $0x8] sm:$0xff pattern:$0x75316420]
      %v1073 = vld.sshfl [vmem:[#allocation1 + $0x10] sm:$0xff pattern:$0x75316420]
      %1074 = vrot.lane.b32.xlu0 %v1071, 60
      %v1075 = vpop.permute.xlu0 %1074
      %1076 = vrot.lane.b32.xlu0 %v1072, 60
      %v1077 = vpop.permute.xlu0 %1076
      %1078 = vrot.lane.b32.xlu0 %v1073, 60
      %v1079 = vpop.permute.xlu0 %1078
      %vm1080 = vcmask 490496
      %v1081 = vsel %vm1080, %v1075, %v1077
      %v1082 = vsel %vm1080, %v1077, %v1079
      %v1085 = vmul.f32 %v1064, %v1081
      %v1086 = vmul.f32 %v1064, %v1082
      %v1087 = vadd.f32 %v942, %v1085
      %v1088 = vadd.f32 %v943, %v1086
      %vm1089 = vcmp.ge.s32.totalorder %v384, 2
      %vm1090 = vcmp.ge.s32.totalorder %v385, 2
      %v1091 = vsel %vm1089, 1, 0
      %v1092 = vsel %vm1090, 1, 0
      %vm1093 = vcmp.eq.s32.totalorder %v1091, 1
      %vm1094 = vcmp.eq.s32.totalorder %v1092, 1
      %v1095 = vsel %vm1093, %v971, 0.0
      %v1096 = vsel %vm1094, %v972, 0.0
      %vm1097 = vcmp.ge.s32.totalorder %v384, 1
      %vm1098 = vcmp.ge.s32.totalorder %v385, 1
      %v1099 = vsel %vm1097, 1, 0
      %v1100 = vsel %vm1098, 1, 0
      %vm1101 = vcmp.eq.s32.totalorder %v1099, 1
      %vm1102 = vcmp.eq.s32.totalorder %v1100, 1
      %v1103 = vsel %vm1101, %v1000, 0.0
      %v1104 = vsel %vm1102, %v1001, 0.0
      %vm1105 = vcmp.lt.s32.totalorder %v384, 15
      %vm1106 = vcmp.lt.s32.totalorder %v385, 15
      %v1107 = vsel %vm1105, 1, 0
      %v1108 = vsel %vm1106, 1, 0
      %vm1109 = vcmp.eq.s32.totalorder %v1107, 1
      %vm1110 = vcmp.eq.s32.totalorder %v1108, 1
      %v1111 = vsel %vm1109, %v1058, 0.0
      %v1112 = vsel %vm1110, %v1059, 0.0
      %vm1113 = vcmp.lt.s32.totalorder %v384, 14
      %vm1114 = vcmp.lt.s32.totalorder %v385, 14
      %v1115 = vsel %vm1113, 1, 0
      %v1116 = vsel %vm1114, 1, 0
      %vm1117 = vcmp.eq.s32.totalorder %v1115, 1
      %vm1118 = vcmp.eq.s32.totalorder %v1116, 1
      %v1119 = vsel %vm1117, %v1087, 0.0
      %v1120 = vsel %vm1118, %v1088, 0.0
      %v1121 = vadd.f32 %v1095, %v1103
      %v1122 = vadd.f32 %v1096, %v1104
      %v1123 = vadd.f32 %v1121, %v1029
      %v1124 = vadd.f32 %v1122, %v1030
      %v1125 = vadd.f32 %v1111, %v1119
      %v1126 = vadd.f32 %v1112, %v1120
      %v1127 = vadd.f32 %v1123, %v1125
      %v1128 = vadd.f32 %v1124, %v1126
      %v1129 = vld [vmem:[%s4] sm:$0xf]
      %1131 = vset.pattern.permute.xlu0 0
      %1132 = vperm.xlu0 %1131, %v1129
      %v1133 = vpop.permute.xlu0 %1132
      %v1135 = vadd.f32 %v1127, %v1133
      %v1136 = vadd.f32 %v1128, %v1133
      %v1137 = vld [vmem:[%s5] sm:$0x3]
      %v1138 = vpack.c.bf16 %v1135, %v1135
      %v1139 = vpack.c.bf16 %v1136, %v1136
      %v1140 = vld [vmem:[%s6] sm:$0xf]
      %1142 = vset.pattern.permute.xlu0 0
      %1143 = vperm.xlu0 %1142, %v1140
      %v1144 = vpop.permute.xlu0 %1143
      %v1147 = vsel %vm299, %v1137, 0
      %v1150 = vsel %vm303, %v1138, 0
      %v1153 = vsel %vm303, %v1139, 0
      %1155 = vmatpush.bf16.msra.mxu0 0
      %1156 = vmatpush.bf16.msra.mxu0 0
      %1157 = vmatpush.bf16.msra.mxu0 0
      %1158 = vmatpush.bf16.msra.mxu0 0
      %1159 = vmatpush.bf16.msra.mxu0 0
      %1160 = vmatpush.bf16.msra.mxu0 0
      %1161 = vmatpush.bf16.msra.mxu0 0
      %1162 = vmatpush.bf16.msra.mxu0 %v1150
      %1163 = vmatmul.bf16.gmra.mxu0 %v1147
      %v1164 = vpop.f32.mrf.mxu0
      %v1165 = vadd.f32 %v1144, %v1164
      %v1166 = vpop.f32.mrf.mxu0
      %1167 = vdwg.mxu0
      %1168 = vmatpush.bf16.msra.mxu0 0
      %1169 = vmatpush.bf16.msra.mxu0 0
      %1170 = vmatpush.bf16.msra.mxu0 0
      %1171 = vmatpush.bf16.msra.mxu0 0
      %1172 = vmatpush.bf16.msra.mxu0 0
      %1173 = vmatpush.bf16.msra.mxu0 0
      %1174 = vmatpush.bf16.msra.mxu0 0
      %1175 = vmatpush.bf16.msra.mxu0 %v1153
      %1176 = vmatmul.bf16.gmra.mxu0 %v1147
      %v1177 = vpop.f32.mrf.mxu0
      %v1178 = vadd.f32 %v1144, %v1177
      %v1179 = vpop.f32.mrf.mxu0
      %1180 = vdwg.mxu0
      %v1181 = vmax.f32 %v1165, 0.0
      %v1182 = vmax.f32 %v1178, 0.0
      %v1185 = vrot.slane %v1182, 4
      %v1186 = vsel %vm345, %v1181, %v1185
      %1188 = vst [vmem:[%s278 + $0x8] sm:$0xff] %v1186
      %p1189 = scmp.lt.s32.totalorder %s18, 1
      %s1190 = scalar_select %p1189, %s18, 1
      %s1191 = smul.addr %s1190, 4
      %s1192 = smul.addr %s1191, 4
      %s1193 = scalar_lea.vmem %s7, %s1192
      // Predicated region
      $region49: #{shuffle_v2_basic_unit.1} parent=47 // pred_check
        %p1194 = pneg %p188
      $region50: #{shuffle_v2_basic_unit.1} parent=47 // pred_check_branch
        %1196 = sbr.rel (%p1194) target = $region52
      $region51: #{shuffle_v2_basic_unit.1} parent=47 // pred_region
        _
      $region52: #{shuffle_v2_basic_unit.1} parent=47 // pred_fallthru
        _
    $region48: #{shuffle_v2_basic_unit.1} parent=5 // pred_fallthru
      _
    %p1197 = scmp.le.s32.totalorder 2, %s13
    // Predicated region
    $region53: #{shuffle_v2_basic_unit.1} parent=5 // pred_check
      %p1198 = pneg %p1197
    $region54: #{shuffle_v2_basic_unit.1} parent=5 // pred_check_branch
      %1200 = sbr.rel (%p1198) target = $region56
    $region55: #{shuffle_v2_basic_unit.1} parent=5 // pred_region
      %s1201 = ssub.s32 %s13, 2
      // Predicated region
      $region57: #{shuffle_v2_basic_unit.1} parent=55 // pred_check
        %p1202 = pneg %p194
      $region58: #{shuffle_v2_basic_unit.1} parent=55 // pred_check_branch
        %1204 = sbr.rel (%p1202) target = $region60
      $region59: #{shuffle_v2_basic_unit.1} parent=55 // pred_region
        %p1205 = scmp.lt.s32.totalorder %s19, 1
        %s1206 = scalar_select %p1205, %s19, 1
        %s1207 = smul.addr %s1206, 4
        %s1208 = smul.addr %s1207, 4
        %s1209 = scalar_lea.vmem %s7, %s1208
      $region60: #{shuffle_v2_basic_unit.1} parent=55 // pred_fallthru
        _
    $region56: #{shuffle_v2_basic_unit.1} parent=5 // pred_fallthru
      _
  $region6: #{shuffle_v2_basic_unit.1} parent=0 // loop_footer
    %s17 = sadd.s32 1, %s13
  $region7: #{shuffle_v2_basic_unit.1} parent=0 // loop_footer_branch
    %12 = sbr.rel target = $region3
  $region8: #{shuffle_v2_basic_unit.1} parent=0 // loop_exit
    _

</llo_original>
